<compile_context>
chip_gen: v5e
topology: v5e:2x2
jax: 0.10.0
libtpu: 0.0.40
codegen_flags: <defaults>
</compile_context>

<pallas_src>
import functools
import math

import jax
import jax.numpy as jnp
import numpy as np
from jax.experimental import pallas as pl
from jax.experimental.pallas import tpu as pltpu

_EPS = 1e-5  # nn.InstanceNorm2d default eps


def _round_up(n, m):
    return ((n + m - 1) // m) * m


# ---------------------------------------------------------------------------
# Host-side (numpy) constant builders
# ---------------------------------------------------------------------------
def _interp_matrix(n_in, n_out):
    """PyTorch bilinear Upsample (align_corners=True) as a dense (n_out, n_in) matrix."""
    m = np.zeros((n_out, n_in), dtype=np.float32)
    if n_in == 1:
        m[:, 0] = 1.0
        return m
    src = np.arange(n_out, dtype=np.float64) * (n_in - 1) / (n_out - 1)
    lo = np.clip(np.floor(src).astype(np.int64), 0, n_in - 2)
    frac = (src - lo).astype(np.float32)
    m[np.arange(n_out), lo] = 1.0 - frac
    m[np.arange(n_out), lo + 1] += frac
    return m


def _upsample_to_padded_flat_matrix(h, w, ho, wo, hw_in_pad, l_pad):
    """(hw_in_pad, l_pad) matrix M with: x_flat @ M == bilinear-x2-upsampled image
    laid out in the zero-row-padded + guarded flat layout the conv taps expect."""
    r = _interp_matrix(h, ho)                       # (ho, h)
    c = _interp_matrix(w, wo)                       # (wo, w)
    u = np.kron(r, c)                               # u[yo*wo+xo, yi*w+xi] = r*c
    m = np.zeros((hw_in_pad, l_pad), dtype=np.float32)
    # upsampled pixel (yo, xo) lives at flat index 1 + (yo+1)*wo + xo
    cols = 1 + (np.arange(ho)[:, None] + 1) * wo + np.arange(wo)[None, :]   # (ho, wo)
    m[: h * w, cols.reshape(-1)] = u.T
    return jnp.asarray(m)


def _col_masks(hs, ws):
    """(3, hs*ws) 0/1 masks (indexed by kw) killing conv taps that wrap across rows."""
    w_idx = np.arange(hs * ws) % ws
    m = np.stack([w_idx >= 1, np.ones_like(w_idx, dtype=bool), w_idx <= ws - 2])
    return jnp.asarray(m.astype(np.float32))


# ---------------------------------------------------------------------------
# Pallas kernels
# ---------------------------------------------------------------------------
def _conv_gate_norm(xflat, w_taps, bias, masks, hs, ws):
    """3x3 conv (pad=1) + relu*sigmoid gate + InstanceNorm for one sample.

    xflat:  (Cin, >= (hs+2)*ws + 2) f32  zero-row-padded, guarded, flattened input
    w_taps: (9, Cout, Cin) bf16          conv weight per (kh, kw) tap
    bias:   (Cout, 1) f32
    masks:  (3, hs*ws) f32               kw-indexed column-wrap masks
    returns (Cout, hs*ws) f32            lane-dense output (last dim = hs*ws)
    """
    hw = hs * ws
    cout = w_taps.shape[1]
    xb = xflat.astype(jnp.bfloat16)                 # MXU-native operands, f32 accum
    acc = jnp.zeros((cout, hw), jnp.float32)
    for kh in range(3):
        for kw in range(3):
            s = kh * ws + kw
            xt = xb[:, s:s + hw]                                # (Cin, hw) shifted tap
            r = jnp.dot(w_taps[kh * 3 + kw], xt,
                        preferred_element_type=jnp.float32)     # (Cout, hw)
            if kw != 1:                                         # kill row-wrap columns
                r = r * masks[kw:kw + 1, :]
            acc = acc + r
    y = acc + bias                                              # conv bias
    g = jnp.maximum(y, 0.0) * jax.nn.sigmoid(y)                 # relu(y) * sigmoid(y)
    # InstanceNorm2d (affine=False): per-channel stats over hw, single pass.
    s1 = jnp.sum(g, axis=1, keepdims=True)
    s2 = jnp.sum(g * g, axis=1, keepdims=True)
    mean = s1 * (1.0 / hw)
    var = s2 * (1.0 / hw) - mean * mean                         # biased variance
    return (g - mean) * jax.lax.rsqrt(var + _EPS)


def _gated_block_kernel(x_ref, w_ref, b_ref, m_ref, o_ref, *, hs, ws):
    o_ref[0] = _conv_gate_norm(x_ref[0], w_ref[...], b_ref[...], m_ref[...], hs, ws)


def _upsample_gated_block_kernel(x_ref, kt_ref, w_ref, b_ref, m_ref, o_ref, *, hs, ws):
    # Fused bilinear x2 upsample: one matmul against a precomputed interpolation
    # matrix whose columns already produce the padded-flat conv layout.
    # Kept in f32/HIGHEST on purpose: the interp weights are not bf16-exact and
    # this matmul is tiny (Cin x HWin x ~hs*ws); the hot conv matmuls are bf16.
    xup = jnp.dot(x_ref[0], kt_ref[...],
                  preferred_element_type=jnp.float32,
                  precision=jax.lax.Precision.HIGHEST)          # (Cin, l_pad)
    o_ref[0] = _conv_gate_norm(xup, w_ref[...], b_ref[...], m_ref[...], hs, ws)


# ---------------------------------------------------------------------------
# Wrappers
# ---------------------------------------------------------------------------
def _prep_weights(w, b):
    cout, cin = w.shape[0], w.shape[1]
    w_taps = jnp.transpose(w, (2, 3, 0, 1)).reshape(9, cout, cin).astype(jnp.bfloat16)
    return w_taps, b.reshape(cout, 1).astype(jnp.float32)


def _to_padded_flat(x):
    """(B, C, H, W) -> (B, C, l_pad): zero-row-padded, guarded, lane-aligned flat layout."""
    b, c, h, w = x.shape
    l_full = (h + 2) * w + 2
    l_pad = _round_up(l_full, 128)
    xp = jnp.pad(x, ((0, 0), (0, 0), (1, 1), (0, 0))).reshape(b, c, (h + 2) * w)
    return jnp.pad(xp, ((0, 0), (0, 0), (1, l_pad - l_full + 1)))


def gated_block(x, w, b):
    """Gated_block forward.  x: (B, Cin, H, W); w: (Cout, Cin, 3, 3); b: (Cout,)."""
    bsz, cin, h, wdim = x.shape
    cout = w.shape[0]
    hw = h * wdim
    xp = _to_padded_flat(x)
    l_pad = xp.shape[-1]
    w_taps, bm = _prep_weights(w, b)
    masks = _col_masks(h, wdim)
    out = pl.pallas_call(
        functools.partial(_gated_block_kernel, hs=h, ws=wdim),
        out_shape=jax.ShapeDtypeStruct((bsz, cout, hw), jnp.float32),
        grid=(bsz,),
        in_specs=[
            pl.BlockSpec((1, cin, l_pad), lambda i: (i, 0, 0)),
            pl.BlockSpec((9, cout, cin), lambda i: (0, 0, 0)),
            pl.BlockSpec((cout, 1), lambda i: (0, 0)),
            pl.BlockSpec((3, hw), lambda i: (0, 0)),
        ],
        out_specs=pl.BlockSpec((1, cout, hw), lambda i: (i, 0, 0)),
        compiler_params=pltpu.CompilerParams(dimension_semantics=("parallel",)),
    )(xp, w_taps, bm, masks)
    return out.reshape(bsz, cout, h, wdim)


def upsample_gated_block(x, w, b):
    """Bilinear x2 upsample (align_corners=True) fused with Gated_block.
    x: (B, Cin, H, W) -> (B, Cout, 2H, 2W)."""
    bsz, cin, h, wdim = x.shape
    cout = w.shape[0]
    ho, wo = 2 * h, 2 * wdim
    hw_out = ho * wo
    hw_in = h * wdim
    hw_in_pad = _round_up(hw_in, 128)
    l_pad = _round_up((ho + 2) * wo + 2, 128)
    xf = jnp.pad(x.reshape(bsz, cin, hw_in),
                 ((0, 0), (0, 0), (0, hw_in_pad - hw_in)))
    kt = _upsample_to_padded_flat_matrix(h, wdim, ho, wo, hw_in_pad, l_pad)
    w_taps, bm = _prep_weights(w, b)
    masks = _col_masks(ho, wo)
    out = pl.pallas_call(
        functools.partial(_upsample_gated_block_kernel, hs=ho, ws=wo),
        out_shape=jax.ShapeDtypeStruct((bsz, cout, hw_out), jnp.float32),
        grid=(bsz,),
        in_specs=[
            pl.BlockSpec((1, cin, hw_in_pad), lambda i: (i, 0, 0)),
            pl.BlockSpec((hw_in_pad, l_pad), lambda i: (0, 0)),
            pl.BlockSpec((9, cout, cin), lambda i: (0, 0, 0)),
            pl.BlockSpec((cout, 1), lambda i: (0, 0)),
            pl.BlockSpec((3, hw_out), lambda i: (0, 0)),
        ],
        out_specs=pl.BlockSpec((1, cout, hw_out), lambda i: (i, 0, 0)),
        compiler_params=pltpu.CompilerParams(dimension_semantics=("parallel",)),
    )(xf, kt, w_taps, bm, masks)
    return out.reshape(bsz, cout, ho, wo)


def decoder_block_gated_forward(x, down, conv_w, conv_b, r1_w, r1_b, r2_w, r2_b):
    """Decoder_block_gated.forward(x, down_tensor) -- NCHW in, NCHW out."""
    x = upsample_gated_block(x, conv_w, conv_b)        # upSample + self.conv (fused)
    # _crop_concat: pad upsampled branch to down's spatial size, concat on channels
    h = down.shape[2] - x.shape[2]
    w = down.shape[3] - x.shape[3]
    x = jnp.pad(x, ((0, 0), (0, 0), (0, h), (0, w)))
    x = jnp.concatenate([down, x], axis=1)
    x = gated_block(x, r1_w, r1_b)                     # convr1
    x = gated_block(x, r2_w, r2_b)                     # convr2
    return x


# ---------------------------------------------------------------------------
# Pure-JAX reference (mirrors the kernel's bf16 operand rounding so the check
# isolates implementation correctness rather than MXU precision)
# ---------------------------------------------------------------------------
def _gated_block_ref(x, w, b):
    xb = x.astype(jnp.bfloat16).astype(jnp.float32)
    wb = w.astype(jnp.bfloat16).astype(jnp.float32)
    y = jax.lax.conv_general_dilated(
        xb, wb, (1, 1), ((1, 1), (1, 1)),
        dimension_numbers=("NCHW", "OIHW", "NCHW"),
        precision=jax.lax.Precision.HIGHEST)
    y = y + b[None, :, None, None]
    g = jnp.maximum(y, 0.0) * jax.nn.sigmoid(y)
    mean = jnp.mean(g, axis=(2, 3), keepdims=True)
    var = jnp.var(g, axis=(2, 3), keepdims=True)
    return (g - mean) / jnp.sqrt(var + _EPS)


def _decoder_ref(x, down, conv_w, conv_b, r1_w, r1_b, r2_w, r2_b):
    _, _, h, w = x.shape
    rh = jnp.asarray(_interp_matrix(h, 2 * h))
    rw = jnp.asarray(_interp_matrix(w, 2 * w))
    x = jnp.einsum("oh,bchw,pw->bcop", rh, x, rw,
                   precision=jax.lax.Precision.HIGHEST)
    x = _gated_block_ref(x, conv_w, conv_b)
    dh = down.shape[2] - x.shape[2]
    dw = down.shape[3] - x.shape[3]
    x = jnp.pad(x, ((0, 0), (0, 0), (0, dh), (0, dw)))
    x = jnp.concatenate([down, x], axis=1)
    x = _gated_block_ref(x, r1_w, r1_b)
    x = _gated_block_ref(x, r2_w, r2_b)
    return x


# ---------------------------------------------------------------------------
# Deterministic parameter init (PyTorch-style uniform, synthetic)
# ---------------------------------------------------------------------------
def _conv_params(key, cin, cout):
    k1, k2 = jax.random.split(key)
    bound = 1.0 / math.sqrt(cin * 9)
    w = jax.random.uniform(k1, (cout, cin, 3, 3), jnp.float32, -bound, bound)
    b = jax.random.uniform(k2, (cout,), jnp.float32, -bound, bound)
    return w, b


if __name__ == "__main__":
    B = 2
    in_channels = 8
    out_channels = 4
    H = W = 8  # decoder input spatial; down_tensor is at 2H x 2W

    key = jax.random.PRNGKey(0)
    k = jax.random.split(key, 5)
    x = jax.random.normal(k[0], (B, in_channels, H, W), jnp.float32)
    down = jax.random.normal(k[1], (B, in_channels // 2, 2 * H, 2 * W), jnp.float32)

    conv_w, conv_b = _conv_params(k[2], in_channels, in_channels // 2)   # self.conv
    r1_w, r1_b = _conv_params(k[3], in_channels, out_channels)           # convr1
    r2_w, r2_b = _conv_params(k[4], out_channels, out_channels)          # convr2

    out = decoder_block_gated_forward(x, down, conv_w, conv_b, r1_w, r1_b, r2_w, r2_b)
    out = jax.block_until_ready(out)

    ref = jax.block_until_ready(
        _decoder_ref(x, down, conv_w, conv_b, r1_w, r1_b, r2_w, r2_b))

    assert out.shape == (B, out_channels, 2 * H, 2 * W), out.shape
    out_np = np.asarray(out)
    assert np.all(np.isfinite(out_np))
    np.testing.assert_allclose(out_np, np.asarray(ref), rtol=1e-2, atol=1e-2)
    print("KERNEL_OK")
</pallas_src>

<mosaic_0001>
module attributes {stable_mosaic.version = 11 : i64} {
  func.func @_upsample_gated_block_kernel(%arg0: i32, %arg1: memref<1x8x128xf32, #tpu.memory_space<vmem>>, %arg2: memref<128x384xf32, #tpu.memory_space<vmem>>, %arg3: memref<9x4x8xbf16, #tpu.memory_space<vmem>>, %arg4: memref<4x1xf32, #tpu.memory_space<vmem>>, %arg5: memref<3x256xf32, #tpu.memory_space<vmem>>, %arg6: memref<1x4x256xf32, #tpu.memory_space<vmem>>) attributes {dimension_semantics = [#tpu.dimension_semantics<parallel>], iteration_bounds = array<i64: 2>, scalar_prefetch = 0 : i64, scratch_operands = 0 : i64, tpu.core_type = #tpu.core_type<tc>, window_params = [{transform_indices = @transform_0, window_bounds = array<i64: 1, 8, 128>}, {pipeline_mode = #tpu.pipeline_mode<synchronous>, transform_indices = @transform_1, window_bounds = array<i64: 128, 384>}, {pipeline_mode = #tpu.pipeline_mode<synchronous>, transform_indices = @transform_2, window_bounds = array<i64: 9, 4, 8>}, {pipeline_mode = #tpu.pipeline_mode<synchronous>, transform_indices = @transform_3, window_bounds = array<i64: 4, 1>}, {pipeline_mode = #tpu.pipeline_mode<synchronous>, transform_indices = @transform_4, window_bounds = array<i64: 3, 256>}, {transform_indices = @transform_5, window_bounds = array<i64: 1, 4, 256>}]} {
    %c0 = arith.constant 0 : index
    %c0_0 = arith.constant 0 : index
    %c0_1 = arith.constant 0 : index
    %0 = vector.load %arg1[%c0, %c0_0, %c0_1] : memref<1x8x128xf32, #tpu.memory_space<vmem>>, vector<1x8x128xf32>
    %1 = vector.shape_cast %0 : vector<1x8x128xf32> to vector<8x128xf32>
    %c0_2 = arith.constant 0 : index
    %c0_3 = arith.constant 0 : index
    %2 = vector.load %arg2[%c0_2, %c0_3] : memref<128x384xf32, #tpu.memory_space<vmem>>, vector<128x384xf32>
    %cst = arith.constant dense<0.000000e+00> : vector<8x384xf32>
    %3 = tpu.matmul %1, %2, %cst {dimension_numbers = #tpu.dot_dimension_numbers<[1], [0], [0], [1], [0, 0, 1, 1], [], []>, precision = #tpu.contract_precision<fp32>} : vector<8x128xf32>, vector<128x384xf32>, vector<8x384xf32> -> vector<8x384xf32>
    %c0_4 = arith.constant 0 : index
    %c0_5 = arith.constant 0 : index
    %c0_6 = arith.constant 0 : index
    %4 = vector.load %arg3[%c0_4, %c0_5, %c0_6] : memref<9x4x8xbf16, #tpu.memory_space<vmem>>, vector<9x4x8xbf16>
    %c0_7 = arith.constant 0 : index
    %c0_8 = arith.constant 0 : index
    %5 = vector.load %arg4[%c0_7, %c0_8] : memref<4x1xf32, #tpu.memory_space<vmem>>, vector<4x1xf32>
    %c0_9 = arith.constant 0 : index
    %c0_10 = arith.constant 0 : index
    %6 = vector.load %arg5[%c0_9, %c0_10] : memref<3x256xf32, #tpu.memory_space<vmem>>, vector<3x256xf32>
    %7 = arith.truncf %3 : vector<8x384xf32> to vector<8x384xbf16>
    %cst_11 = arith.constant 0.000000e+00 : f32
    %8 = vector.broadcast %cst_11 : f32 to vector<4x256xf32>
    %9 = vector.extract_strided_slice %7 {offsets = [0, 0], sizes = [8, 256], strides = [1, 1]} : vector<8x384xbf16> to vector<8x256xbf16>
    %10 = vector.extract_strided_slice %4 {offsets = [0, 0, 0], sizes = [1, 4, 8], strides = [1, 1, 1]} : vector<9x4x8xbf16> to vector<1x4x8xbf16>
    %11 = vector.shape_cast %10 : vector<1x4x8xbf16> to vector<4x8xbf16>
    %cst_12 = arith.constant dense<0.000000e+00> : vector<4x256xf32>
    %12 = tpu.matmul %11, %9, %cst_12 {dimension_numbers = #tpu.dot_dimension_numbers<[1], [0], [0], [1], [0, 0, 1, 1], [], []>} : vector<4x8xbf16>, vector<8x256xbf16>, vector<4x256xf32> -> vector<4x256xf32>
    %13 = vector.extract_strided_slice %6 {offsets = [0, 0], sizes = [1, 256], strides = [1, 1]} : vector<3x256xf32> to vector<1x256xf32>
    %14 = vector.broadcast %13 : vector<1x256xf32> to vector<4x256xf32>
    %15 = arith.mulf %12, %14 : vector<4x256xf32>
    %16 = arith.addf %8, %15 : vector<4x256xf32>
    %17 = vector.extract_strided_slice %7 {offsets = [0, 1], sizes = [8, 256], strides = [1, 1]} : vector<8x384xbf16> to vector<8x256xbf16>
    %18 = vector.extract_strided_slice %4 {offsets = [1, 0, 0], sizes = [1, 4, 8], strides = [1, 1, 1]} : vector<9x4x8xbf16> to vector<1x4x8xbf16>
    %19 = vector.shape_cast %18 : vector<1x4x8xbf16> to vector<4x8xbf16>
    %cst_13 = arith.constant dense<0.000000e+00> : vector<4x256xf32>
    %20 = tpu.matmul %19, %17, %cst_13 {dimension_numbers = #tpu.dot_dimension_numbers<[1], [0], [0], [1], [0, 0, 1, 1], [], []>} : vector<4x8xbf16>, vector<8x256xbf16>, vector<4x256xf32> -> vector<4x256xf32>
    %21 = arith.addf %16, %20 : vector<4x256xf32>
    %22 = vector.extract_strided_slice %7 {offsets = [0, 2], sizes = [8, 256], strides = [1, 1]} : vector<8x384xbf16> to vector<8x256xbf16>
    %23 = vector.extract_strided_slice %4 {offsets = [2, 0, 0], sizes = [1, 4, 8], strides = [1, 1, 1]} : vector<9x4x8xbf16> to vector<1x4x8xbf16>
    %24 = vector.shape_cast %23 : vector<1x4x8xbf16> to vector<4x8xbf16>
    %cst_14 = arith.constant dense<0.000000e+00> : vector<4x256xf32>
    %25 = tpu.matmul %24, %22, %cst_14 {dimension_numbers = #tpu.dot_dimension_numbers<[1], [0], [0], [1], [0, 0, 1, 1], [], []>} : vector<4x8xbf16>, vector<8x256xbf16>, vector<4x256xf32> -> vector<4x256xf32>
    %26 = vector.extract_strided_slice %6 {offsets = [2, 0], sizes = [1, 256], strides = [1, 1]} : vector<3x256xf32> to vector<1x256xf32>
    %27 = vector.broadcast %26 : vector<1x256xf32> to vector<4x256xf32>
    %28 = arith.mulf %25, %27 : vector<4x256xf32>
    %29 = arith.addf %21, %28 : vector<4x256xf32>
    %30 = vector.extract_strided_slice %7 {offsets = [0, 16], sizes = [8, 256], strides = [1, 1]} : vector<8x384xbf16> to vector<8x256xbf16>
    %31 = vector.extract_strided_slice %4 {offsets = [3, 0, 0], sizes = [1, 4, 8], strides = [1, 1, 1]} : vector<9x4x8xbf16> to vector<1x4x8xbf16>
    %32 = vector.shape_cast %31 : vector<1x4x8xbf16> to vector<4x8xbf16>
    %cst_15 = arith.constant dense<0.000000e+00> : vector<4x256xf32>
    %33 = tpu.matmul %32, %30, %cst_15 {dimension_numbers = #tpu.dot_dimension_numbers<[1], [0], [0], [1], [0, 0, 1, 1], [], []>} : vector<4x8xbf16>, vector<8x256xbf16>, vector<4x256xf32> -> vector<4x256xf32>
    %34 = vector.extract_strided_slice %6 {offsets = [0, 0], sizes = [1, 256], strides = [1, 1]} : vector<3x256xf32> to vector<1x256xf32>
    %35 = vector.broadcast %34 : vector<1x256xf32> to vector<4x256xf32>
    %36 = arith.mulf %33, %35 : vector<4x256xf32>
    %37 = arith.addf %29, %36 : vector<4x256xf32>
    %38 = vector.extract_strided_slice %7 {offsets = [0, 17], sizes = [8, 256], strides = [1, 1]} : vector<8x384xbf16> to vector<8x256xbf16>
    %39 = vector.extract_strided_slice %4 {offsets = [4, 0, 0], sizes = [1, 4, 8], strides = [1, 1, 1]} : vector<9x4x8xbf16> to vector<1x4x8xbf16>
    %40 = vector.shape_cast %39 : vector<1x4x8xbf16> to vector<4x8xbf16>
    %cst_16 = arith.constant dense<0.000000e+00> : vector<4x256xf32>
    %41 = tpu.matmul %40, %38, %cst_16 {dimension_numbers = #tpu.dot_dimension_numbers<[1], [0], [0], [1], [0, 0, 1, 1], [], []>} : vector<4x8xbf16>, vector<8x256xbf16>, vector<4x256xf32> -> vector<4x256xf32>
    %42 = arith.addf %37, %41 : vector<4x256xf32>
    %43 = vector.extract_strided_slice %7 {offsets = [0, 18], sizes = [8, 256], strides = [1, 1]} : vector<8x384xbf16> to vector<8x256xbf16>
    %44 = vector.extract_strided_slice %4 {offsets = [5, 0, 0], sizes = [1, 4, 8], strides = [1, 1, 1]} : vector<9x4x8xbf16> to vector<1x4x8xbf16>
    %45 = vector.shape_cast %44 : vector<1x4x8xbf16> to vector<4x8xbf16>
    %cst_17 = arith.constant dense<0.000000e+00> : vector<4x256xf32>
    %46 = tpu.matmul %45, %43, %cst_17 {dimension_numbers = #tpu.dot_dimension_numbers<[1], [0], [0], [1], [0, 0, 1, 1], [], []>} : vector<4x8xbf16>, vector<8x256xbf16>, vector<4x256xf32> -> vector<4x256xf32>
    %47 = vector.extract_strided_slice %6 {offsets = [2, 0], sizes = [1, 256], strides = [1, 1]} : vector<3x256xf32> to vector<1x256xf32>
    %48 = vector.broadcast %47 : vector<1x256xf32> to vector<4x256xf32>
    %49 = arith.mulf %46, %48 : vector<4x256xf32>
    %50 = arith.addf %42, %49 : vector<4x256xf32>
    %51 = vector.extract_strided_slice %7 {offsets = [0, 32], sizes = [8, 256], strides = [1, 1]} : vector<8x384xbf16> to vector<8x256xbf16>
    %52 = vector.extract_strided_slice %4 {offsets = [6, 0, 0], sizes = [1, 4, 8], strides = [1, 1, 1]} : vector<9x4x8xbf16> to vector<1x4x8xbf16>
    %53 = vector.shape_cast %52 : vector<1x4x8xbf16> to vector<4x8xbf16>
    %cst_18 = arith.constant dense<0.000000e+00> : vector<4x256xf32>
    %54 = tpu.matmul %53, %51, %cst_18 {dimension_numbers = #tpu.dot_dimension_numbers<[1], [0], [0], [1], [0, 0, 1, 1], [], []>} : vector<4x8xbf16>, vector<8x256xbf16>, vector<4x256xf32> -> vector<4x256xf32>
    %55 = vector.extract_strided_slice %6 {offsets = [0, 0], sizes = [1, 256], strides = [1, 1]} : vector<3x256xf32> to vector<1x256xf32>
    %56 = vector.broadcast %55 : vector<1x256xf32> to vector<4x256xf32>
    %57 = arith.mulf %54, %56 : vector<4x256xf32>
    %58 = arith.addf %50, %57 : vector<4x256xf32>
    %59 = vector.extract_strided_slice %7 {offsets = [0, 33], sizes = [8, 256], strides = [1, 1]} : vector<8x384xbf16> to vector<8x256xbf16>
    %60 = vector.extract_strided_slice %4 {offsets = [7, 0, 0], sizes = [1, 4, 8], strides = [1, 1, 1]} : vector<9x4x8xbf16> to vector<1x4x8xbf16>
    %61 = vector.shape_cast %60 : vector<1x4x8xbf16> to vector<4x8xbf16>
    %cst_19 = arith.constant dense<0.000000e+00> : vector<4x256xf32>
    %62 = tpu.matmul %61, %59, %cst_19 {dimension_numbers = #tpu.dot_dimension_numbers<[1], [0], [0], [1], [0, 0, 1, 1], [], []>} : vector<4x8xbf16>, vector<8x256xbf16>, vector<4x256xf32> -> vector<4x256xf32>
    %63 = arith.addf %58, %62 : vector<4x256xf32>
    %64 = vector.extract_strided_slice %7 {offsets = [0, 34], sizes = [8, 256], strides = [1, 1]} : vector<8x384xbf16> to vector<8x256xbf16>
    %65 = vector.extract_strided_slice %4 {offsets = [8, 0, 0], sizes = [1, 4, 8], strides = [1, 1, 1]} : vector<9x4x8xbf16> to vector<1x4x8xbf16>
    %66 = vector.shape_cast %65 : vector<1x4x8xbf16> to vector<4x8xbf16>
    %cst_20 = arith.constant dense<0.000000e+00> : vector<4x256xf32>
    %67 = tpu.matmul %66, %64, %cst_20 {dimension_numbers = #tpu.dot_dimension_numbers<[1], [0], [0], [1], [0, 0, 1, 1], [], []>} : vector<4x8xbf16>, vector<8x256xbf16>, vector<4x256xf32> -> vector<4x256xf32>
    %68 = vector.extract_strided_slice %6 {offsets = [2, 0], sizes = [1, 256], strides = [1, 1]} : vector<3x256xf32> to vector<1x256xf32>
    %69 = vector.broadcast %68 : vector<1x256xf32> to vector<4x256xf32>
    %70 = arith.mulf %67, %69 : vector<4x256xf32>
    %71 = arith.addf %63, %70 : vector<4x256xf32>
    %72 = vector.broadcast %5 : vector<4x1xf32> to vector<4x256xf32>
    %73 = arith.addf %71, %72 : vector<4x256xf32>
    %cst_21 = arith.constant 0.000000e+00 : f32
    %74 = vector.broadcast %cst_21 : f32 to vector<4x256xf32>
    %75 = arith.maximumf %73, %74 : vector<4x256xf32>
    %76 = arith.negf %73 : vector<4x256xf32>
    %77 = math.exp %76 : vector<4x256xf32>
    %cst_22 = arith.constant 1.000000e+00 : f32
    %78 = vector.broadcast %cst_22 : f32 to vector<4x256xf32>
    %79 = arith.addf %78, %77 : vector<4x256xf32>
    %80 = arith.divf %78, %79 : vector<4x256xf32>
    %81 = arith.mulf %75, %80 : vector<4x256xf32>
    %cst_23 = arith.constant dense<0.000000e+00> : vector<4xf32>
    %82 = vector.multi_reduction <add>, %81, %cst_23 [1] : vector<4x256xf32> to vector<4xf32>
    %83 = vector.shape_cast %82 : vector<4xf32> to vector<4x1xf32>
    %84 = arith.mulf %81, %81 : vector<4x256xf32>
    %cst_24 = arith.constant dense<0.000000e+00> : vector<4xf32>
    %85 = vector.multi_reduction <add>, %84, %cst_24 [1] : vector<4x256xf32> to vector<4xf32>
    %86 = vector.shape_cast %85 : vector<4xf32> to vector<4x1xf32>
    %cst_25 = arith.constant 3.906250e-03 : f32
    %87 = vector.broadcast %cst_25 : f32 to vector<4x1xf32>
    %88 = arith.mulf %83, %87 : vector<4x1xf32>
    %cst_26 = arith.constant 3.906250e-03 : f32
    %89 = vector.broadcast %cst_26 : f32 to vector<4x1xf32>
    %90 = arith.mulf %86, %89 : vector<4x1xf32>
    %91 = arith.mulf %88, %88 : vector<4x1xf32>
    %92 = arith.subf %90, %91 : vector<4x1xf32>
    %93 = vector.broadcast %88 : vector<4x1xf32> to vector<4x256xf32>
    %94 = arith.subf %81, %93 : vector<4x256xf32>
    %cst_27 = arith.constant 9.99999974E-6 : f32
    %95 = vector.broadcast %cst_27 : f32 to vector<4x1xf32>
    %96 = arith.addf %92, %95 : vector<4x1xf32>
    %97 = math.rsqrt %96 : vector<4x1xf32>
    %98 = vector.broadcast %97 : vector<4x1xf32> to vector<4x256xf32>
    %99 = arith.mulf %94, %98 : vector<4x256xf32>
    %c0_28 = arith.constant 0 : index
    %c0_29 = arith.constant 0 : index
    %c0_30 = arith.constant 0 : index
    %100 = vector.load %arg6[%c0_28, %c0_29, %c0_30] : memref<1x4x256xf32, #tpu.memory_space<vmem>>, vector<1x4x256xf32>
    %101 = vector.shape_cast %100 : vector<1x4x256xf32> to vector<4x256xf32>
    %102 = vector.shape_cast %99 : vector<4x256xf32> to vector<1x4x256xf32>
    tpu.vector_store %arg6[%c0_28, %c0_29, %c0_30], %102 {strides = array<i32>} : memref<1x4x256xf32, #tpu.memory_space<vmem>>, vector<1x4x256xf32>,
    return
  }
  func.func @transform_0(%arg0: i32) -> (i32, i32, i32) {
    %c0_i32 = arith.constant 0 : i32
    %c0_i32_0 = arith.constant 0 : i32
    %c0_i32_1 = arith.constant 0 : i32
    return %arg0, %c0_i32, %c0_i32_0 : i32, i32, i32
  }
  func.func @transform_1(%arg0: i32) -> (i32, i32) {
    %c0_i32 = arith.constant 0 : i32
    %c0_i32_0 = arith.constant 0 : i32
    %c0_i32_1 = arith.constant 0 : i32
    return %c0_i32, %c0_i32_0 : i32, i32
  }
  func.func @transform_2(%arg0: i32) -> (i32, i32, i32) {
    %c0_i32 = arith.constant 0 : i32
    %c0_i32_0 = arith.constant 0 : i32
    %c0_i32_1 = arith.constant 0 : i32
    %c0_i32_2 = arith.constant 0 : i32
    return %c0_i32, %c0_i32_0, %c0_i32_1 : i32, i32, i32
  }
  func.func @transform_3(%arg0: i32) -> (i32, i32) {
    %c0_i32 = arith.constant 0 : i32
    %c0_i32_0 = arith.constant 0 : i32
    %c0_i32_1 = arith.constant 0 : i32
    return %c0_i32, %c0_i32_0 : i32, i32
  }
  func.func @transform_4(%arg0: i32) -> (i32, i32) {
    %c0_i32 = arith.constant 0 : i32
    %c0_i32_0 = arith.constant 0 : i32
    %c0_i32_1 = arith.constant 0 : i32
    return %c0_i32, %c0_i32_0 : i32, i32
  }
  func.func @transform_5(%arg0: i32) -> (i32, i32, i32) {
    %c0_i32 = arith.constant 0 : i32
    %c0_i32_0 = arith.constant 0 : i32
    %c0_i32_1 = arith.constant 0 : i32
    return %arg0, %c0_i32, %c0_i32_0 : i32, i32, i32
  }
}

</mosaic_0001>

<llo_original>
// kernel: tpu_custom_call.1
$region0: #{tpu_custom_call.1}
  #allocation0 [shape = 'u32[]', space=smem, size = 0x4, offset = 0x4, fixed_abs, tag = 'smem constant byte address 0x4 - core index']
  #allocation1 [shape = 'u32[72,128]{1,0:T(1,128)}', space=vmem, size = 0x9000, scoped, tag = 'internal scratch']
  %s0 = inlined_call_operand.vmem [shape: f32[2,8,128], index: 0, kind: input, shape index: {}]
  %s1 = inlined_call_operand.hbm [shape: f32[128,384], index: 1, kind: input, shape index: {}]
  %s2 = inlined_call_operand.vmem [shape: bf16[9,4,8], index: 2, kind: input, shape index: {}]
  %s3 = inlined_call_operand.vmem [shape: f32[4,1], index: 3, kind: input, shape index: {}]
  %s4 = inlined_call_operand.vmem [shape: f32[3,256], index: 4, kind: input, shape index: {}]
  %s5 = inlined_call_operand.hbm [shape: f32[2,4,256], index: 5, kind: output, shape index: {}]
  %s6 = sld [smem:[#allocation0]]
  $region57: #{tpu_custom_call.1} parent=0
    _
  %s8 = ssub.s32 1, %s6
  %s9 = scalar_select 0, %s8, %s6
  $region1: #{tpu_custom_call.1} parent=0
    #allocation2 [shape = 'u8[196608]{0}', space=vmem, size = 0x30000, scoped, tag = 'input window, operand 1, single buffered']
    #allocation3 [shape = 's32[2]{0}', space=sflag, size = 0x8, scoped, tag = 'scoped memory for tpu_custom_call.1']
    #allocation4 [shape = 's32[2]{0}', space=sflag, size = 0x8, scoped, tag = 'scoped memory for tpu_custom_call.1']
    #allocation5 [shape = 'u8[8192]{0}', space=vmem, size = 0x2000, scoped, tag = 'output window, operand 0']
    %10 = vsyncpa [#allocation3], 0
    %11 = vsyncpa [#allocation4], 0
    %s12 = scalar_lea.sflag [#allocation4], 1
    %13 = vsyncpa %s12, 0
    loop: start=0, step=1, limit=4
    $region2: #{tpu_custom_call.1} parent=1 // loop_pre_header
      _
    $region3: #{tpu_custom_call.1} parent=1 // loop_header
      %s15 = sphi 0, %s19
      %p16 = scmp.ge.s32.totalorder %s15, 4
      %s25 = sphi 0, %s27
      %s28 = sphi 0, %s25
      %s29 = sphi 0, %s28
      %s45 = sphi 0, %s29
      %s49 = sphi 0, %s49
      %s51 = sphi 0, %s49
      %s52 = sphi 0, %s51
      %s66 = sphi 0, %s52
      %s70 = sphi 0, %s70
      %s72 = sphi 0, %s70
      %s73 = sphi 0, %s72
      %s87 = sphi 0, %s73
      %s91 = sphi 0, %s91
      %s93 = sphi 0, %s91
      %s94 = sphi 0, %s93
      %s108 = sphi 0, %s94
      %s112 = sphi 0, %s112
      %s114 = sphi 0, %s112
      %s115 = sphi 0, %s114
      %s129 = sphi 0, %s115
      %s135 = sphi 0, %s137
      %s138 = sphi 0, %s135
      %s139 = sphi 0, %s138
      %s155 = sphi 0, %s139
    $region4: #{tpu_custom_call.1} parent=1 // loop_header_branch
      %18 = sbr.rel (%p16) target = $region8
    $region5: #{tpu_custom_call.1} parent=1 // loop_body
      %s20 = ssub.s32 %s15, 1
      %s21 = ssub.s32 %s15, 2
      %s22 = sadd.s32 %s15, 1
      %s23 = ssub.s32 %s15, %s22
      %p24 = scmp.eq.s32.totalorder %s23, 0
      %s26 = sadd.s32 %s25, 1
      %s27 = scalar_select %p24, %s25, %s26
      %p30 = pneg %p24
      %p31 = scmp.eq.s32.totalorder %s15, 1
      %p32 = por %p30, %p31
      %p33 = scmp.ne.s32.totalorder %s25, %s28
      %p34 = scmp.eq.s32.totalorder %s15, 0
      %p35 = por %p33, %p34
      %p36 = scmp.ne.s32.totalorder %s25, %s28
      %p37 = scmp.eq.s32.totalorder %s20, 1
      %p38 = por %p36, %p37
      %p39 = scmp.ne.s32.totalorder %s28, %s29
      %p40 = scmp.eq.s32.totalorder %s20, 0
      %p41 = por %p39, %p40
      %p42 = scmp.ne.s32.totalorder %s28, %s29
      %p43 = scmp.eq.s32.totalorder %s21, 1
      %p44 = por %p42, %p43
      %p46 = scmp.ne.s32.totalorder %s29, %s45
      %p47 = scmp.eq.s32.totalorder %s21, 0
      %p48 = por %p46, %p47
      %s50 = sadd.s32 %s49, 1
      %p53 = scmp.eq.s32.totalorder %s15, 1
      %p54 = scmp.ne.s32.totalorder %s49, %s51
      %p55 = scmp.eq.s32.totalorder %s15, 0
      %p56 = por %p54, %p55
      %p57 = scmp.ne.s32.totalorder %s49, %s51
      %p58 = scmp.eq.s32.totalorder %s20, 1
      %p59 = por %p57, %p58
      %p60 = scmp.ne.s32.totalorder %s51, %s52
      %p61 = scmp.eq.s32.totalorder %s20, 0
      %p62 = por %p60, %p61
      %p63 = scmp.ne.s32.totalorder %s51, %s52
      %p64 = scmp.eq.s32.totalorder %s21, 1
      %p65 = por %p63, %p64
      %p67 = scmp.ne.s32.totalorder %s52, %s66
      %p68 = scmp.eq.s32.totalorder %s21, 0
      %p69 = por %p67, %p68
      %s71 = sadd.s32 %s70, 1
      %p74 = scmp.eq.s32.totalorder %s15, 1
      %p75 = scmp.ne.s32.totalorder %s70, %s72
      %p76 = scmp.eq.s32.totalorder %s15, 0
      %p77 = por %p75, %p76
      %p78 = scmp.ne.s32.totalorder %s70, %s72
      %p79 = scmp.eq.s32.totalorder %s20, 1
      %p80 = por %p78, %p79
      %p81 = scmp.ne.s32.totalorder %s72, %s73
      %p82 = scmp.eq.s32.totalorder %s20, 0
      %p83 = por %p81, %p82
      %p84 = scmp.ne.s32.totalorder %s72, %s73
      %p85 = scmp.eq.s32.totalorder %s21, 1
      %p86 = por %p84, %p85
      %p88 = scmp.ne.s32.totalorder %s73, %s87
      %p89 = scmp.eq.s32.totalorder %s21, 0
      %p90 = por %p88, %p89
      %s92 = sadd.s32 %s91, 1
      %p95 = scmp.eq.s32.totalorder %s15, 1
      %p96 = scmp.ne.s32.totalorder %s91, %s93
      %p97 = scmp.eq.s32.totalorder %s15, 0
      %p98 = por %p96, %p97
      %p99 = scmp.ne.s32.totalorder %s91, %s93
      %p100 = scmp.eq.s32.totalorder %s20, 1
      %p101 = por %p99, %p100
      %p102 = scmp.ne.s32.totalorder %s93, %s94
      %p103 = scmp.eq.s32.totalorder %s20, 0
      %p104 = por %p102, %p103
      %p105 = scmp.ne.s32.totalorder %s93, %s94
      %p106 = scmp.eq.s32.totalorder %s21, 1
      %p107 = por %p105, %p106
      %p109 = scmp.ne.s32.totalorder %s94, %s108
      %p110 = scmp.eq.s32.totalorder %s21, 0
      %p111 = por %p109, %p110
      %s113 = sadd.s32 %s112, 1
      %p116 = scmp.eq.s32.totalorder %s15, 1
      %p117 = scmp.ne.s32.totalorder %s112, %s114
      %p118 = scmp.eq.s32.totalorder %s15, 0
      %p119 = por %p117, %p118
      %p120 = scmp.ne.s32.totalorder %s112, %s114
      %p121 = scmp.eq.s32.totalorder %s20, 1
      %p122 = por %p120, %p121
      %p123 = scmp.ne.s32.totalorder %s114, %s115
      %p124 = scmp.eq.s32.totalorder %s20, 0
      %p125 = por %p123, %p124
      %p126 = scmp.ne.s32.totalorder %s114, %s115
      %p127 = scmp.eq.s32.totalorder %s21, 1
      %p128 = por %p126, %p127
      %p130 = scmp.ne.s32.totalorder %s115, %s129
      %p131 = scmp.eq.s32.totalorder %s21, 0
      %p132 = por %p130, %p131
      %s133 = ssub.s32 %s15, %s22
      %p134 = scmp.eq.s32.totalorder %s133, 0
      %s136 = sadd.s32 %s135, 1
      %s137 = scalar_select %p134, %s135, %s136
      %p140 = pneg %p134
      %p141 = scmp.eq.s32.totalorder %s15, 1
      %p142 = por %p140, %p141
      %p143 = scmp.ne.s32.totalorder %s135, %s138
      %p144 = scmp.eq.s32.totalorder %s15, 0
      %p145 = por %p143, %p144
      %p146 = scmp.ne.s32.totalorder %s135, %s138
      %p147 = scmp.eq.s32.totalorder %s20, 1
      %p148 = por %p146, %p147
      %p149 = scmp.ne.s32.totalorder %s138, %s139
      %p150 = scmp.eq.s32.totalorder %s20, 0
      %p151 = por %p149, %p150
      %p152 = scmp.ne.s32.totalorder %s138, %s139
      %p153 = scmp.eq.s32.totalorder %s21, 1
      %p154 = por %p152, %p153
      %p156 = scmp.ne.s32.totalorder %s139, %s155
      %p157 = scmp.eq.s32.totalorder %s21, 0
      %p158 = por %p156, %p157
      %p159 = scmp.le.s32.totalorder 1, %s15
      %p160 = scmp.lt.s32.totalorder %s15, 3
      %p161 = pnand %p159, %p160
      %p162 = pneg %p161
      // Predicated region
      $region9: #{tpu_custom_call.1} parent=5 // pred_check
        _
      $region10: #{tpu_custom_call.1} parent=5 // pred_check_branch
        %164 = sbr.rel (%p161) target = $region12
      $region11: #{tpu_custom_call.1} parent=5 // pred_region
        %s165 = ssub.s32 %s15, 1
        // Predicated region
        $region13: #{tpu_custom_call.1} parent=11 // pred_check
          %p166 = pneg %p62
        $region14: #{tpu_custom_call.1} parent=11 // pred_check_branch
          %168 = sbr.rel (%p166) target = $region16
        $region15: #{tpu_custom_call.1} parent=11 // pred_region
          %170 = vsyncadd [#allocation3], 0
          %s171 = sshll.u32 %s1, 4
          %s172 = int_to_ptr.hbm [resolvable:$true] %s171
          %s173 = sshll.u32 [#allocation2], 4
          %s174 = int_to_ptr.vmem [resolvable:$true] %s173
          %179 = dma.hbm_to_vmem [thread:$0]  %s172, 6144, %s174, [#allocation3], 384, 384, 24
        $region16: #{tpu_custom_call.1} parent=11 // pred_fallthru
          _
        // Predicated region
        $region17: #{tpu_custom_call.1} parent=11 // pred_check
          %p180 = pneg %p83
        $region18: #{tpu_custom_call.1} parent=11 // pred_check_branch
          %182 = sbr.rel (%p180) target = $region20
        $region19: #{tpu_custom_call.1} parent=11 // pred_region
          _
        $region20: #{tpu_custom_call.1} parent=11 // pred_fallthru
          _
        // Predicated region
        $region21: #{tpu_custom_call.1} parent=11 // pred_check
          %p183 = pneg %p104
        $region22: #{tpu_custom_call.1} parent=11 // pred_check_branch
          %185 = sbr.rel (%p183) target = $region24
        $region23: #{tpu_custom_call.1} parent=11 // pred_region
          _
        $region24: #{tpu_custom_call.1} parent=11 // pred_fallthru
          _
        // Predicated region
        $region25: #{tpu_custom_call.1} parent=11 // pred_check
          %p186 = pneg %p125
        $region26: #{tpu_custom_call.1} parent=11 // pred_check_branch
          %188 = sbr.rel (%p186) target = $region28
        $region27: #{tpu_custom_call.1} parent=11 // pred_region
          _
        $region28: #{tpu_custom_call.1} parent=11 // pred_fallthru
          _
      $region12: #{tpu_custom_call.1} parent=5 // pred_fallthru
        _
      %p189 = scmp.lt.s32.totalorder %s15, 2
      // Predicated region
      $region29: #{tpu_custom_call.1} parent=5 // pred_check
        %p190 = pneg %p189
      $region30: #{tpu_custom_call.1} parent=5 // pred_check_branch
        %192 = sbr.rel (%p190) target = $region32
      $region31: #{tpu_custom_call.1} parent=5 // pred_region
        // Predicated region
        $region33: #{tpu_custom_call.1} parent=31 // pred_check
          %p193 = pneg %p35
        $region34: #{tpu_custom_call.1} parent=31 // pred_check_branch
          %195 = sbr.rel (%p193) target = $region36
        $region35: #{tpu_custom_call.1} parent=31 // pred_region
          %p196 = scmp.lt.s32.totalorder %s15, 1
          %s197 = scalar_select %p196, %s15, 1
          %s198 = smul.addr %s197, 8
          %s199 = scalar_lea.vmem %s0, %s198
        $region36: #{tpu_custom_call.1} parent=31 // pred_fallthru
          _
      $region32: #{tpu_custom_call.1} parent=5 // pred_fallthru
        _
      %p200 = scmp.le.s32.totalorder 1, %s15
      %p201 = scmp.lt.s32.totalorder %s15, 3
      %p202 = pnand %p200, %p201
      %p203 = pneg %p202
      // Predicated region
      $region37: #{tpu_custom_call.1} parent=5 // pred_check
        _
      $region38: #{tpu_custom_call.1} parent=5 // pred_check_branch
        %205 = sbr.rel (%p202) target = $region40
      $region39: #{tpu_custom_call.1} parent=5 // pred_region
        %s206 = ssub.s32 %s15, 1
        // Predicated region
        $region41: #{tpu_custom_call.1} parent=39 // pred_check
          %p207 = pneg %p62
        $region42: #{tpu_custom_call.1} parent=39 // pred_check_branch
          %209 = sbr.rel (%p207) target = $region44
        $region43: #{tpu_custom_call.1} parent=39 // pred_region
          %211 = dma.done [#allocation3], 6144
        $region44: #{tpu_custom_call.1} parent=39 // pred_fallthru
          _
        %p212 = scmp.lt.s32.totalorder %s20, 1
        %s213 = scalar_select %p212, %s20, 1
        %s214 = smul.addr %s213, 8
        %s215 = scalar_lea.vmem %s0, %s214
        %p216 = pneg %p41
        %p217 = pneg %p38
        %p218 = pneg %p62
        %p219 = pneg %p59
        %p220 = pneg %p83
        %p221 = pneg %p80
        %p222 = pneg %p104
        %p223 = pneg %p101
        %p224 = pneg %p125
        %p225 = pneg %p122
        %p226 = pneg %p151
        %p227 = pneg %p148
        %s228 = sand.u32 %s138, 1
        %s229 = scalar_lea.sflag [#allocation4], %s228
        %s230 = sand.u32 %s138, 1
        %s231 = smul.addr %s230, 8
        %s232 = scalar_lea.vmem [#allocation5], %s231
        %p233 = scmp.lt.s32.totalorder %s20, 1
        %s234 = scalar_select %p233, %s20, 1
        %s235 = smul.addr %s234, 8
        %s236 = scalar_lea.vmem %s0, %s235
        %v238 = vld [vmem:[%s236] sm:$0xff]
        %v239 = vld [vmem:[#allocation2] sm:$0xff]
        %v240 = vld [vmem:[#allocation2 + $0x8] sm:$0xff]
        %v241 = vld [vmem:[#allocation2 + $0x10] sm:$0xff]
        %v242 = vld [vmem:[#allocation2 + $0x18] sm:$0xff]
        %v243 = vld [vmem:[#allocation2 + $0x20] sm:$0xff]
        %v244 = vld [vmem:[#allocation2 + $0x28] sm:$0xff]
        %v245 = vld [vmem:[#allocation2 + $0x30] sm:$0xff]
        %v246 = vld [vmem:[#allocation2 + $0x38] sm:$0xff]
        %v247 = vld [vmem:[#allocation2 + $0x40] sm:$0xff]
        %v248 = vld [vmem:[#allocation2 + $0x48] sm:$0xff]
        %v249 = vld [vmem:[#allocation2 + $0x50] sm:$0xff]
        %v250 = vld [vmem:[#allocation2 + $0x58] sm:$0xff]
        %v251 = vld [vmem:[#allocation2 + $0x60] sm:$0xff]
        %v252 = vld [vmem:[#allocation2 + $0x68] sm:$0xff]
        %v253 = vld [vmem:[#allocation2 + $0x70] sm:$0xff]
        %v254 = vld [vmem:[#allocation2 + $0x78] sm:$0xff]
        %v255 = vld [vmem:[#allocation2 + $0x80] sm:$0xff]
        %v256 = vld [vmem:[#allocation2 + $0x88] sm:$0xff]
        %v257 = vld [vmem:[#allocation2 + $0x90] sm:$0xff]
        %v258 = vld [vmem:[#allocation2 + $0x98] sm:$0xff]
        %v259 = vld [vmem:[#allocation2 + $0xa0] sm:$0xff]
        %v260 = vld [vmem:[#allocation2 + $0xa8] sm:$0xff]
        %v261 = vld [vmem:[#allocation2 + $0xb0] sm:$0xff]
        %v262 = vld [vmem:[#allocation2 + $0xb8] sm:$0xff]
        %v263 = vld [vmem:[#allocation2 + $0xc0] sm:$0xff]
        %v264 = vld [vmem:[#allocation2 + $0xc8] sm:$0xff]
        %v265 = vld [vmem:[#allocation2 + $0xd0] sm:$0xff]
        %v266 = vld [vmem:[#allocation2 + $0xd8] sm:$0xff]
        %v267 = vld [vmem:[#allocation2 + $0xe0] sm:$0xff]
        %v268 = vld [vmem:[#allocation2 + $0xe8] sm:$0xff]
        %v269 = vld [vmem:[#allocation2 + $0xf0] sm:$0xff]
        %v270 = vld [vmem:[#allocation2 + $0xf8] sm:$0xff]
        %v271 = vld [vmem:[#allocation2 + $0x100] sm:$0xff]
        %v272 = vld [vmem:[#allocation2 + $0x108] sm:$0xff]
        %v273 = vld [vmem:[#allocation2 + $0x110] sm:$0xff]
        %v274 = vld [vmem:[#allocation2 + $0x118] sm:$0xff]
        %v275 = vld [vmem:[#allocation2 + $0x120] sm:$0xff]
        %v276 = vld [vmem:[#allocation2 + $0x128] sm:$0xff]
        %v277 = vld [vmem:[#allocation2 + $0x130] sm:$0xff]
        %v278 = vld [vmem:[#allocation2 + $0x138] sm:$0xff]
        %v279 = vld [vmem:[#allocation2 + $0x140] sm:$0xff]
        %v280 = vld [vmem:[#allocation2 + $0x148] sm:$0xff]
        %v281 = vld [vmem:[#allocation2 + $0x150] sm:$0xff]
        %v282 = vld [vmem:[#allocation2 + $0x158] sm:$0xff]
        %v283 = vld [vmem:[#allocation2 + $0x160] sm:$0xff]
        %v284 = vld [vmem:[#allocation2 + $0x168] sm:$0xff]
        %v285 = vld [vmem:[#allocation2 + $0x170] sm:$0xff]
        %v286 = vld [vmem:[#allocation2 + $0x178] sm:$0xff]
        %v287 = vand.u32 %v284, 4294901760
        %288 = vmatpush.msra.mxu0 %v287
        %v289 = vand.u32 %v281, 4294901760
        %290 = vmatpush.msra.mxu0 %v289
        %v291 = vand.u32 %v278, 4294901760
        %292 = vmatpush.msra.mxu0 %v291
        %v293 = vand.u32 %v275, 4294901760
        %294 = vmatpush.msra.mxu0 %v293
        %v295 = vand.u32 %v272, 4294901760
        %296 = vmatpush.msra.mxu0 %v295
        %v297 = vand.u32 %v269, 4294901760
        %298 = vmatpush.msra.mxu0 %v297
        %v299 = vand.u32 %v266, 4294901760
        %300 = vmatpush.msra.mxu0 %v299
        %v301 = vand.u32 %v263, 4294901760
        %302 = vmatpush.msra.mxu0 %v301
        %v303 = vand.u32 %v260, 4294901760
        %304 = vmatpush.msra.mxu0 %v303
        %v305 = vand.u32 %v257, 4294901760
        %306 = vmatpush.msra.mxu0 %v305
        %v307 = vand.u32 %v254, 4294901760
        %308 = vmatpush.msra.mxu0 %v307
        %v309 = vand.u32 %v251, 4294901760
        %310 = vmatpush.msra.mxu0 %v309
        %v311 = vand.u32 %v248, 4294901760
        %312 = vmatpush.msra.mxu0 %v311
        %v313 = vand.u32 %v245, 4294901760
        %314 = vmatpush.msra.mxu0 %v313
        %v315 = vand.u32 %v242, 4294901760
        %316 = vmatpush.msra.mxu0 %v315
        %v317 = vand.u32 %v239, 4294901760
        %318 = vmatpush.msra.mxu0 %v317
        %v319 = vand.u32 %v238, 4294901760
        %v320 = vsub.f32 %v238, %v319
        %v321 = vand.u32 %v320, 4294901760
        %v322 = vsub.f32 %v320, %v321
        %v323 = vand.u32 %v322, 4294901760
        %324 = vmatmul.f32.gmra.mxu0 %v323
        %v325 = vpop.f32.mrf.mxu0
        %v326 = vadd.f32 0.0, %v325
        %327 = vdwg.mxu0
        %v328 = vand.u32 %v284, 4294901760
        %v329 = vsub.f32 %v284, %v328
        %v330 = vand.u32 %v329, 4294901760
        %v331 = vsub.f32 %v329, %v330
        %v332 = vand.u32 %v331, 4294901760
        %333 = vmatpush.msra.mxu0 %v332
        %v334 = vand.u32 %v281, 4294901760
        %v335 = vsub.f32 %v281, %v334
        %v336 = vand.u32 %v335, 4294901760
        %v337 = vsub.f32 %v335, %v336
        %v338 = vand.u32 %v337, 4294901760
        %339 = vmatpush.msra.mxu0 %v338
        %v340 = vand.u32 %v278, 4294901760
        %v341 = vsub.f32 %v278, %v340
        %v342 = vand.u32 %v341, 4294901760
        %v343 = vsub.f32 %v341, %v342
        %v344 = vand.u32 %v343, 4294901760
        %345 = vmatpush.msra.mxu0 %v344
        %v346 = vand.u32 %v275, 4294901760
        %v347 = vsub.f32 %v275, %v346
        %v348 = vand.u32 %v347, 4294901760
        %v349 = vsub.f32 %v347, %v348
        %v350 = vand.u32 %v349, 4294901760
        %351 = vmatpush.msra.mxu0 %v350
        %v352 = vand.u32 %v272, 4294901760
        %v353 = vsub.f32 %v272, %v352
        %v354 = vand.u32 %v353, 4294901760
        %v355 = vsub.f32 %v353, %v354
        %v356 = vand.u32 %v355, 4294901760
        %357 = vmatpush.msra.mxu0 %v356
        %v358 = vand.u32 %v269, 4294901760
        %v359 = vsub.f32 %v269, %v358
        %v360 = vand.u32 %v359, 4294901760
        %v361 = vsub.f32 %v359, %v360
        %v362 = vand.u32 %v361, 4294901760
        %363 = vmatpush.msra.mxu0 %v362
        %v364 = vand.u32 %v266, 4294901760
        %v365 = vsub.f32 %v266, %v364
        %v366 = vand.u32 %v365, 4294901760
        %v367 = vsub.f32 %v365, %v366
        %v368 = vand.u32 %v367, 4294901760
        %369 = vmatpush.msra.mxu0 %v368
        %v370 = vand.u32 %v263, 4294901760
        %v371 = vsub.f32 %v263, %v370
        %v372 = vand.u32 %v371, 4294901760
        %v373 = vsub.f32 %v371, %v372
        %v374 = vand.u32 %v373, 4294901760
        %375 = vmatpush.msra.mxu0 %v374
        %v376 = vand.u32 %v260, 4294901760
        %v377 = vsub.f32 %v260, %v376
        %v378 = vand.u32 %v377, 4294901760
        %v379 = vsub.f32 %v377, %v378
        %v380 = vand.u32 %v379, 4294901760
        %381 = vmatpush.msra.mxu0 %v380
        %v382 = vand.u32 %v257, 4294901760
        %v383 = vsub.f32 %v257, %v382
        %v384 = vand.u32 %v383, 4294901760
        %v385 = vsub.f32 %v383, %v384
        %v386 = vand.u32 %v385, 4294901760
        %387 = vmatpush.msra.mxu0 %v386
        %v388 = vand.u32 %v254, 4294901760
        %v389 = vsub.f32 %v254, %v388
        %v390 = vand.u32 %v389, 4294901760
        %v391 = vsub.f32 %v389, %v390
        %v392 = vand.u32 %v391, 4294901760
        %393 = vmatpush.msra.mxu0 %v392
        %v394 = vand.u32 %v251, 4294901760
        %v395 = vsub.f32 %v251, %v394
        %v396 = vand.u32 %v395, 4294901760
        %v397 = vsub.f32 %v395, %v396
        %v398 = vand.u32 %v397, 4294901760
        %399 = vmatpush.msra.mxu0 %v398
        %v400 = vand.u32 %v248, 4294901760
        %v401 = vsub.f32 %v248, %v400
        %v402 = vand.u32 %v401, 4294901760
        %v403 = vsub.f32 %v401, %v402
        %v404 = vand.u32 %v403, 4294901760
        %405 = vmatpush.msra.mxu0 %v404
        %v406 = vand.u32 %v245, 4294901760
        %v407 = vsub.f32 %v245, %v406
        %v408 = vand.u32 %v407, 4294901760
        %v409 = vsub.f32 %v407, %v408
        %v410 = vand.u32 %v409, 4294901760
        %411 = vmatpush.msra.mxu0 %v410
        %v412 = vand.u32 %v242, 4294901760
        %v413 = vsub.f32 %v242, %v412
        %v414 = vand.u32 %v413, 4294901760
        %v415 = vsub.f32 %v413, %v414
        %v416 = vand.u32 %v415, 4294901760
        %417 = vmatpush.msra.mxu0 %v416
        %v418 = vand.u32 %v239, 4294901760
        %v419 = vsub.f32 %v239, %v418
        %v420 = vand.u32 %v419, 4294901760
        %v421 = vsub.f32 %v419, %v420
        %v422 = vand.u32 %v421, 4294901760
        %423 = vmatpush.msra.mxu0 %v422
        %v424 = vand.u32 %v238, 4294901760
        %425 = vmatmul.f32.gmra.mxu0 %v424
        %v426 = vpop.f32.mrf.mxu0
        %v427 = vadd.f32 %v326, %v426
        %428 = vdwg.mxu0
        %v429 = vand.u32 %v284, 4294901760
        %v430 = vsub.f32 %v284, %v429
        %431 = vmatpush.msra.mxu0 %v430
        %v432 = vand.u32 %v281, 4294901760
        %v433 = vsub.f32 %v281, %v432
        %434 = vmatpush.msra.mxu0 %v433
        %v435 = vand.u32 %v278, 4294901760
        %v436 = vsub.f32 %v278, %v435
        %437 = vmatpush.msra.mxu0 %v436
        %v438 = vand.u32 %v275, 4294901760
        %v439 = vsub.f32 %v275, %v438
        %440 = vmatpush.msra.mxu0 %v439
        %v441 = vand.u32 %v272, 4294901760
        %v442 = vsub.f32 %v272, %v441
        %443 = vmatpush.msra.mxu0 %v442
        %v444 = vand.u32 %v269, 4294901760
        %v445 = vsub.f32 %v269, %v444
        %446 = vmatpush.msra.mxu0 %v445
        %v447 = vand.u32 %v266, 4294901760
        %v448 = vsub.f32 %v266, %v447
        %449 = vmatpush.msra.mxu0 %v448
        %v450 = vand.u32 %v263, 4294901760
        %v451 = vsub.f32 %v263, %v450
        %452 = vmatpush.msra.mxu0 %v451
        %v453 = vand.u32 %v260, 4294901760
        %v454 = vsub.f32 %v260, %v453
        %455 = vmatpush.msra.mxu0 %v454
        %v456 = vand.u32 %v257, 4294901760
        %v457 = vsub.f32 %v257, %v456
        %458 = vmatpush.msra.mxu0 %v457
        %v459 = vand.u32 %v254, 4294901760
        %v460 = vsub.f32 %v254, %v459
        %461 = vmatpush.msra.mxu0 %v460
        %v462 = vand.u32 %v251, 4294901760
        %v463 = vsub.f32 %v251, %v462
        %464 = vmatpush.msra.mxu0 %v463
        %v465 = vand.u32 %v248, 4294901760
        %v466 = vsub.f32 %v248, %v465
        %467 = vmatpush.msra.mxu0 %v466
        %v468 = vand.u32 %v245, 4294901760
        %v469 = vsub.f32 %v245, %v468
        %470 = vmatpush.msra.mxu0 %v469
        %v471 = vand.u32 %v242, 4294901760
        %v472 = vsub.f32 %v242, %v471
        %473 = vmatpush.msra.mxu0 %v472
        %v474 = vand.u32 %v239, 4294901760
        %v475 = vsub.f32 %v239, %v474
        %476 = vmatpush.msra.mxu0 %v475
        %v477 = vand.u32 %v238, 4294901760
        %v478 = vsub.f32 %v238, %v477
        %479 = vmatmul.f32.gmra.mxu0 %v478
        %v480 = vpop.f32.mrf.mxu0
        %v481 = vadd.f32 %v427, %v480
        %482 = vdwg.mxu0
        %v483 = vand.u32 %v284, 4294901760
        %484 = vmatpush.msra.mxu0 %v483
        %v485 = vand.u32 %v281, 4294901760
        %486 = vmatpush.msra.mxu0 %v485
        %v487 = vand.u32 %v278, 4294901760
        %488 = vmatpush.msra.mxu0 %v487
        %v489 = vand.u32 %v275, 4294901760
        %490 = vmatpush.msra.mxu0 %v489
        %v491 = vand.u32 %v272, 4294901760
        %492 = vmatpush.msra.mxu0 %v491
        %v493 = vand.u32 %v269, 4294901760
        %494 = vmatpush.msra.mxu0 %v493
        %v495 = vand.u32 %v266, 4294901760
        %496 = vmatpush.msra.mxu0 %v495
        %v497 = vand.u32 %v263, 4294901760
        %498 = vmatpush.msra.mxu0 %v497
        %v499 = vand.u32 %v260, 4294901760
        %500 = vmatpush.msra.mxu0 %v499
        %v501 = vand.u32 %v257, 4294901760
        %502 = vmatpush.msra.mxu0 %v501
        %v503 = vand.u32 %v254, 4294901760
        %504 = vmatpush.msra.mxu0 %v503
        %v505 = vand.u32 %v251, 4294901760
        %506 = vmatpush.msra.mxu0 %v505
        %v507 = vand.u32 %v248, 4294901760
        %508 = vmatpush.msra.mxu0 %v507
        %v509 = vand.u32 %v245, 4294901760
        %510 = vmatpush.msra.mxu0 %v509
        %v511 = vand.u32 %v242, 4294901760
        %512 = vmatpush.msra.mxu0 %v511
        %v513 = vand.u32 %v239, 4294901760
        %514 = vmatpush.msra.mxu0 %v513
        %v515 = vand.u32 %v238, 4294901760
        %v516 = vsub.f32 %v238, %v515
        %v517 = vand.u32 %v516, 4294901760
        %518 = vmatmul.f32.gmra.mxu0 %v517
        %v519 = vpop.f32.mrf.mxu0
        %v520 = vadd.f32 %v481, %v519
        %521 = vdwg.mxu0
        %v522 = vand.u32 %v284, 4294901760
        %v523 = vsub.f32 %v284, %v522
        %v524 = vand.u32 %v523, 4294901760
        %525 = vmatpush.msra.mxu0 %v524
        %v526 = vand.u32 %v281, 4294901760
        %v527 = vsub.f32 %v281, %v526
        %v528 = vand.u32 %v527, 4294901760
        %529 = vmatpush.msra.mxu0 %v528
        %v530 = vand.u32 %v278, 4294901760
        %v531 = vsub.f32 %v278, %v530
        %v532 = vand.u32 %v531, 4294901760
        %533 = vmatpush.msra.mxu0 %v532
        %v534 = vand.u32 %v275, 4294901760
        %v535 = vsub.f32 %v275, %v534
        %v536 = vand.u32 %v535, 4294901760
        %537 = vmatpush.msra.mxu0 %v536
        %v538 = vand.u32 %v272, 4294901760
        %v539 = vsub.f32 %v272, %v538
        %v540 = vand.u32 %v539, 4294901760
        %541 = vmatpush.msra.mxu0 %v540
        %v542 = vand.u32 %v269, 4294901760
        %v543 = vsub.f32 %v269, %v542
        %v544 = vand.u32 %v543, 4294901760
        %545 = vmatpush.msra.mxu0 %v544
        %v546 = vand.u32 %v266, 4294901760
        %v547 = vsub.f32 %v266, %v546
        %v548 = vand.u32 %v547, 4294901760
        %549 = vmatpush.msra.mxu0 %v548
        %v550 = vand.u32 %v263, 4294901760
        %v551 = vsub.f32 %v263, %v550
        %v552 = vand.u32 %v551, 4294901760
        %553 = vmatpush.msra.mxu0 %v552
        %v554 = vand.u32 %v260, 4294901760
        %v555 = vsub.f32 %v260, %v554
        %v556 = vand.u32 %v555, 4294901760
        %557 = vmatpush.msra.mxu0 %v556
        %v558 = vand.u32 %v257, 4294901760
        %v559 = vsub.f32 %v257, %v558
        %v560 = vand.u32 %v559, 4294901760
        %561 = vmatpush.msra.mxu0 %v560
        %v562 = vand.u32 %v254, 4294901760
        %v563 = vsub.f32 %v254, %v562
        %v564 = vand.u32 %v563, 4294901760
        %565 = vmatpush.msra.mxu0 %v564
        %v566 = vand.u32 %v251, 4294901760
        %v567 = vsub.f32 %v251, %v566
        %v568 = vand.u32 %v567, 4294901760
        %569 = vmatpush.msra.mxu0 %v568
        %v570 = vand.u32 %v248, 4294901760
        %v571 = vsub.f32 %v248, %v570
        %v572 = vand.u32 %v571, 4294901760
        %573 = vmatpush.msra.mxu0 %v572
        %v574 = vand.u32 %v245, 4294901760
        %v575 = vsub.f32 %v245, %v574
        %v576 = vand.u32 %v575, 4294901760
        %577 = vmatpush.msra.mxu0 %v576
        %v578 = vand.u32 %v242, 4294901760
        %v579 = vsub.f32 %v242, %v578
        %v580 = vand.u32 %v579, 4294901760
        %581 = vmatpush.msra.mxu0 %v580
        %v582 = vand.u32 %v239, 4294901760
        %v583 = vsub.f32 %v239, %v582
        %v584 = vand.u32 %v583, 4294901760
        %585 = vmatpush.msra.mxu0 %v584
        %v586 = vand.u32 %v238, 4294901760
        %587 = vmatmul.f32.gmra.mxu0 %v586
        %v588 = vpop.f32.mrf.mxu0
        %v589 = vadd.f32 %v520, %v588
        %590 = vdwg.mxu0
        %v591 = vand.u32 %v284, 4294901760
        %592 = vmatpush.msra.mxu0 %v591
        %v593 = vand.u32 %v281, 4294901760
        %594 = vmatpush.msra.mxu0 %v593
        %v595 = vand.u32 %v278, 4294901760
        %596 = vmatpush.msra.mxu0 %v595
        %v597 = vand.u32 %v275, 4294901760
        %598 = vmatpush.msra.mxu0 %v597
        %v599 = vand.u32 %v272, 4294901760
        %600 = vmatpush.msra.mxu0 %v599
        %v601 = vand.u32 %v269, 4294901760
        %602 = vmatpush.msra.mxu0 %v601
        %v603 = vand.u32 %v266, 4294901760
        %604 = vmatpush.msra.mxu0 %v603
        %v605 = vand.u32 %v263, 4294901760
        %606 = vmatpush.msra.mxu0 %v605
        %v607 = vand.u32 %v260, 4294901760
        %608 = vmatpush.msra.mxu0 %v607
        %v609 = vand.u32 %v257, 4294901760
        %610 = vmatpush.msra.mxu0 %v609
        %v611 = vand.u32 %v254, 4294901760
        %612 = vmatpush.msra.mxu0 %v611
        %v613 = vand.u32 %v251, 4294901760
        %614 = vmatpush.msra.mxu0 %v613
        %v615 = vand.u32 %v248, 4294901760
        %616 = vmatpush.msra.mxu0 %v615
        %v617 = vand.u32 %v245, 4294901760
        %618 = vmatpush.msra.mxu0 %v617
        %v619 = vand.u32 %v242, 4294901760
        %620 = vmatpush.msra.mxu0 %v619
        %v621 = vand.u32 %v239, 4294901760
        %622 = vmatpush.msra.mxu0 %v621
        %v623 = vand.u32 %v238, 4294901760
        %624 = vmatmul.f32.gmra.mxu0 %v623
        %v625 = vpop.f32.mrf.mxu0
        %v626 = vadd.f32 %v589, %v625
        %627 = vdwg.mxu0
        %v628 = vand.u32 %v285, 4294901760
        %629 = vmatpush.msra.mxu0 %v628
        %v630 = vand.u32 %v282, 4294901760
        %631 = vmatpush.msra.mxu0 %v630
        %v632 = vand.u32 %v279, 4294901760
        %633 = vmatpush.msra.mxu0 %v632
        %v634 = vand.u32 %v276, 4294901760
        %635 = vmatpush.msra.mxu0 %v634
        %v636 = vand.u32 %v273, 4294901760
        %637 = vmatpush.msra.mxu0 %v636
        %v638 = vand.u32 %v270, 4294901760
        %639 = vmatpush.msra.mxu0 %v638
        %v640 = vand.u32 %v267, 4294901760
        %641 = vmatpush.msra.mxu0 %v640
        %v642 = vand.u32 %v264, 4294901760
        %643 = vmatpush.msra.mxu0 %v642
        %v644 = vand.u32 %v261, 4294901760
        %645 = vmatpush.msra.mxu0 %v644
        %v646 = vand.u32 %v258, 4294901760
        %647 = vmatpush.msra.mxu0 %v646
        %v648 = vand.u32 %v255, 4294901760
        %649 = vmatpush.msra.mxu0 %v648
        %v650 = vand.u32 %v252, 4294901760
        %651 = vmatpush.msra.mxu0 %v650
        %v652 = vand.u32 %v249, 4294901760
        %653 = vmatpush.msra.mxu0 %v652
        %v654 = vand.u32 %v246, 4294901760
        %655 = vmatpush.msra.mxu0 %v654
        %v656 = vand.u32 %v243, 4294901760
        %657 = vmatpush.msra.mxu0 %v656
        %v658 = vand.u32 %v240, 4294901760
        %659 = vmatpush.msra.mxu0 %v658
        %v660 = vand.u32 %v238, 4294901760
        %v661 = vsub.f32 %v238, %v660
        %v662 = vand.u32 %v661, 4294901760
        %v663 = vsub.f32 %v661, %v662
        %v664 = vand.u32 %v663, 4294901760
        %665 = vmatmul.f32.gmra.mxu0 %v664
        %v666 = vpop.f32.mrf.mxu0
        %v667 = vadd.f32 0.0, %v666
        %668 = vdwg.mxu0
        %v669 = vand.u32 %v285, 4294901760
        %v670 = vsub.f32 %v285, %v669
        %v671 = vand.u32 %v670, 4294901760
        %v672 = vsub.f32 %v670, %v671
        %v673 = vand.u32 %v672, 4294901760
        %674 = vmatpush.msra.mxu0 %v673
        %v675 = vand.u32 %v282, 4294901760
        %v676 = vsub.f32 %v282, %v675
        %v677 = vand.u32 %v676, 4294901760
        %v678 = vsub.f32 %v676, %v677
        %v679 = vand.u32 %v678, 4294901760
        %680 = vmatpush.msra.mxu0 %v679
        %v681 = vand.u32 %v279, 4294901760
        %v682 = vsub.f32 %v279, %v681
        %v683 = vand.u32 %v682, 4294901760
        %v684 = vsub.f32 %v682, %v683
        %v685 = vand.u32 %v684, 4294901760
        %686 = vmatpush.msra.mxu0 %v685
        %v687 = vand.u32 %v276, 4294901760
        %v688 = vsub.f32 %v276, %v687
        %v689 = vand.u32 %v688, 4294901760
        %v690 = vsub.f32 %v688, %v689
        %v691 = vand.u32 %v690, 4294901760
        %692 = vmatpush.msra.mxu0 %v691
        %v693 = vand.u32 %v273, 4294901760
        %v694 = vsub.f32 %v273, %v693
        %v695 = vand.u32 %v694, 4294901760
        %v696 = vsub.f32 %v694, %v695
        %v697 = vand.u32 %v696, 4294901760
        %698 = vmatpush.msra.mxu0 %v697
        %v699 = vand.u32 %v270, 4294901760
        %v700 = vsub.f32 %v270, %v699
        %v701 = vand.u32 %v700, 4294901760
        %v702 = vsub.f32 %v700, %v701
        %v703 = vand.u32 %v702, 4294901760
        %704 = vmatpush.msra.mxu0 %v703
        %v705 = vand.u32 %v267, 4294901760
        %v706 = vsub.f32 %v267, %v705
        %v707 = vand.u32 %v706, 4294901760
        %v708 = vsub.f32 %v706, %v707
        %v709 = vand.u32 %v708, 4294901760
        %710 = vmatpush.msra.mxu0 %v709
        %v711 = vand.u32 %v264, 4294901760
        %v712 = vsub.f32 %v264, %v711
        %v713 = vand.u32 %v712, 4294901760
        %v714 = vsub.f32 %v712, %v713
        %v715 = vand.u32 %v714, 4294901760
        %716 = vmatpush.msra.mxu0 %v715
        %v717 = vand.u32 %v261, 4294901760
        %v718 = vsub.f32 %v261, %v717
        %v719 = vand.u32 %v718, 4294901760
        %v720 = vsub.f32 %v718, %v719
        %v721 = vand.u32 %v720, 4294901760
        %722 = vmatpush.msra.mxu0 %v721
        %v723 = vand.u32 %v258, 4294901760
        %v724 = vsub.f32 %v258, %v723
        %v725 = vand.u32 %v724, 4294901760
        %v726 = vsub.f32 %v724, %v725
        %v727 = vand.u32 %v726, 4294901760
        %728 = vmatpush.msra.mxu0 %v727
        %v729 = vand.u32 %v255, 4294901760
        %v730 = vsub.f32 %v255, %v729
        %v731 = vand.u32 %v730, 4294901760
        %v732 = vsub.f32 %v730, %v731
        %v733 = vand.u32 %v732, 4294901760
        %734 = vmatpush.msra.mxu0 %v733
        %v735 = vand.u32 %v252, 4294901760
        %v736 = vsub.f32 %v252, %v735
        %v737 = vand.u32 %v736, 4294901760
        %v738 = vsub.f32 %v736, %v737
        %v739 = vand.u32 %v738, 4294901760
        %740 = vmatpush.msra.mxu0 %v739
        %v741 = vand.u32 %v249, 4294901760
        %v742 = vsub.f32 %v249, %v741
        %v743 = vand.u32 %v742, 4294901760
        %v744 = vsub.f32 %v742, %v743
        %v745 = vand.u32 %v744, 4294901760
        %746 = vmatpush.msra.mxu0 %v745
        %v747 = vand.u32 %v246, 4294901760
        %v748 = vsub.f32 %v246, %v747
        %v749 = vand.u32 %v748, 4294901760
        %v750 = vsub.f32 %v748, %v749
        %v751 = vand.u32 %v750, 4294901760
        %752 = vmatpush.msra.mxu0 %v751
        %v753 = vand.u32 %v243, 4294901760
        %v754 = vsub.f32 %v243, %v753
        %v755 = vand.u32 %v754, 4294901760
        %v756 = vsub.f32 %v754, %v755
        %v757 = vand.u32 %v756, 4294901760
        %758 = vmatpush.msra.mxu0 %v757
        %v759 = vand.u32 %v240, 4294901760
        %v760 = vsub.f32 %v240, %v759
        %v761 = vand.u32 %v760, 4294901760
        %v762 = vsub.f32 %v760, %v761
        %v763 = vand.u32 %v762, 4294901760
        %764 = vmatpush.msra.mxu0 %v763
        %v765 = vand.u32 %v238, 4294901760
        %766 = vmatmul.f32.gmra.mxu0 %v765
        %v767 = vpop.f32.mrf.mxu0
        %v768 = vadd.f32 %v667, %v767
        %769 = vdwg.mxu0
        %v770 = vand.u32 %v285, 4294901760
        %v771 = vsub.f32 %v285, %v770
        %772 = vmatpush.msra.mxu0 %v771
        %v773 = vand.u32 %v282, 4294901760
        %v774 = vsub.f32 %v282, %v773
        %775 = vmatpush.msra.mxu0 %v774
        %v776 = vand.u32 %v279, 4294901760
        %v777 = vsub.f32 %v279, %v776
        %778 = vmatpush.msra.mxu0 %v777
        %v779 = vand.u32 %v276, 4294901760
        %v780 = vsub.f32 %v276, %v779
        %781 = vmatpush.msra.mxu0 %v780
        %v782 = vand.u32 %v273, 4294901760
        %v783 = vsub.f32 %v273, %v782
        %784 = vmatpush.msra.mxu0 %v783
        %v785 = vand.u32 %v270, 4294901760
        %v786 = vsub.f32 %v270, %v785
        %787 = vmatpush.msra.mxu0 %v786
        %v788 = vand.u32 %v267, 4294901760
        %v789 = vsub.f32 %v267, %v788
        %790 = vmatpush.msra.mxu0 %v789
        %v791 = vand.u32 %v264, 4294901760
        %v792 = vsub.f32 %v264, %v791
        %793 = vmatpush.msra.mxu0 %v792
        %v794 = vand.u32 %v261, 4294901760
        %v795 = vsub.f32 %v261, %v794
        %796 = vmatpush.msra.mxu0 %v795
        %v797 = vand.u32 %v258, 4294901760
        %v798 = vsub.f32 %v258, %v797
        %799 = vmatpush.msra.mxu0 %v798
        %v800 = vand.u32 %v255, 4294901760
        %v801 = vsub.f32 %v255, %v800
        %802 = vmatpush.msra.mxu0 %v801
        %v803 = vand.u32 %v252, 4294901760
        %v804 = vsub.f32 %v252, %v803
        %805 = vmatpush.msra.mxu0 %v804
        %v806 = vand.u32 %v249, 4294901760
        %v807 = vsub.f32 %v249, %v806
        %808 = vmatpush.msra.mxu0 %v807
        %v809 = vand.u32 %v246, 4294901760
        %v810 = vsub.f32 %v246, %v809
        %811 = vmatpush.msra.mxu0 %v810
        %v812 = vand.u32 %v243, 4294901760
        %v813 = vsub.f32 %v243, %v812
        %814 = vmatpush.msra.mxu0 %v813
        %v815 = vand.u32 %v240, 4294901760
        %v816 = vsub.f32 %v240, %v815
        %817 = vmatpush.msra.mxu0 %v816
        %v818 = vand.u32 %v238, 4294901760
        %v819 = vsub.f32 %v238, %v818
        %820 = vmatmul.f32.gmra.mxu0 %v819
        %v821 = vpop.f32.mrf.mxu0
        %v822 = vadd.f32 %v768, %v821
        %823 = vdwg.mxu0
        %v824 = vand.u32 %v285, 4294901760
        %825 = vmatpush.msra.mxu0 %v824
        %v826 = vand.u32 %v282, 4294901760
        %827 = vmatpush.msra.mxu0 %v826
        %v828 = vand.u32 %v279, 4294901760
        %829 = vmatpush.msra.mxu0 %v828
        %v830 = vand.u32 %v276, 4294901760
        %831 = vmatpush.msra.mxu0 %v830
        %v832 = vand.u32 %v273, 4294901760
        %833 = vmatpush.msra.mxu0 %v832
        %v834 = vand.u32 %v270, 4294901760
        %835 = vmatpush.msra.mxu0 %v834
        %v836 = vand.u32 %v267, 4294901760
        %837 = vmatpush.msra.mxu0 %v836
        %v838 = vand.u32 %v264, 4294901760
        %839 = vmatpush.msra.mxu0 %v838
        %v840 = vand.u32 %v261, 4294901760
        %841 = vmatpush.msra.mxu0 %v840
        %v842 = vand.u32 %v258, 4294901760
        %843 = vmatpush.msra.mxu0 %v842
        %v844 = vand.u32 %v255, 4294901760
        %845 = vmatpush.msra.mxu0 %v844
        %v846 = vand.u32 %v252, 4294901760
        %847 = vmatpush.msra.mxu0 %v846
        %v848 = vand.u32 %v249, 4294901760
        %849 = vmatpush.msra.mxu0 %v848
        %v850 = vand.u32 %v246, 4294901760
        %851 = vmatpush.msra.mxu0 %v850
        %v852 = vand.u32 %v243, 4294901760
        %853 = vmatpush.msra.mxu0 %v852
        %v854 = vand.u32 %v240, 4294901760
        %855 = vmatpush.msra.mxu0 %v854
        %v856 = vand.u32 %v238, 4294901760
        %v857 = vsub.f32 %v238, %v856
        %v858 = vand.u32 %v857, 4294901760
        %859 = vmatmul.f32.gmra.mxu0 %v858
        %v860 = vpop.f32.mrf.mxu0
        %v861 = vadd.f32 %v822, %v860
        %862 = vdwg.mxu0
        %v863 = vand.u32 %v285, 4294901760
        %v864 = vsub.f32 %v285, %v863
        %v865 = vand.u32 %v864, 4294901760
        %866 = vmatpush.msra.mxu0 %v865
        %v867 = vand.u32 %v282, 4294901760
        %v868 = vsub.f32 %v282, %v867
        %v869 = vand.u32 %v868, 4294901760
        %870 = vmatpush.msra.mxu0 %v869
        %v871 = vand.u32 %v279, 4294901760
        %v872 = vsub.f32 %v279, %v871
        %v873 = vand.u32 %v872, 4294901760
        %874 = vmatpush.msra.mxu0 %v873
        %v875 = vand.u32 %v276, 4294901760
        %v876 = vsub.f32 %v276, %v875
        %v877 = vand.u32 %v876, 4294901760
        %878 = vmatpush.msra.mxu0 %v877
        %v879 = vand.u32 %v273, 4294901760
        %v880 = vsub.f32 %v273, %v879
        %v881 = vand.u32 %v880, 4294901760
        %882 = vmatpush.msra.mxu0 %v881
        %v883 = vand.u32 %v270, 4294901760
        %v884 = vsub.f32 %v270, %v883
        %v885 = vand.u32 %v884, 4294901760
        %886 = vmatpush.msra.mxu0 %v885
        %v887 = vand.u32 %v267, 4294901760
        %v888 = vsub.f32 %v267, %v887
        %v889 = vand.u32 %v888, 4294901760
        %890 = vmatpush.msra.mxu0 %v889
        %v891 = vand.u32 %v264, 4294901760
        %v892 = vsub.f32 %v264, %v891
        %v893 = vand.u32 %v892, 4294901760
        %894 = vmatpush.msra.mxu0 %v893
        %v895 = vand.u32 %v261, 4294901760
        %v896 = vsub.f32 %v261, %v895
        %v897 = vand.u32 %v896, 4294901760
        %898 = vmatpush.msra.mxu0 %v897
        %v899 = vand.u32 %v258, 4294901760
        %v900 = vsub.f32 %v258, %v899
        %v901 = vand.u32 %v900, 4294901760
        %902 = vmatpush.msra.mxu0 %v901
        %v903 = vand.u32 %v255, 4294901760
        %v904 = vsub.f32 %v255, %v903
        %v905 = vand.u32 %v904, 4294901760
        %906 = vmatpush.msra.mxu0 %v905
        %v907 = vand.u32 %v252, 4294901760
        %v908 = vsub.f32 %v252, %v907
        %v909 = vand.u32 %v908, 4294901760
        %910 = vmatpush.msra.mxu0 %v909
        %v911 = vand.u32 %v249, 4294901760
        %v912 = vsub.f32 %v249, %v911
        %v913 = vand.u32 %v912, 4294901760
        %914 = vmatpush.msra.mxu0 %v913
        %v915 = vand.u32 %v246, 4294901760
        %v916 = vsub.f32 %v246, %v915
        %v917 = vand.u32 %v916, 4294901760
        %918 = vmatpush.msra.mxu0 %v917
        %v919 = vand.u32 %v243, 4294901760
        %v920 = vsub.f32 %v243, %v919
        %v921 = vand.u32 %v920, 4294901760
        %922 = vmatpush.msra.mxu0 %v921
        %v923 = vand.u32 %v240, 4294901760
        %v924 = vsub.f32 %v240, %v923
        %v925 = vand.u32 %v924, 4294901760
        %926 = vmatpush.msra.mxu0 %v925
        %v927 = vand.u32 %v238, 4294901760
        %928 = vmatmul.f32.gmra.mxu0 %v927
        %v929 = vpop.f32.mrf.mxu0
        %v930 = vadd.f32 %v861, %v929
        %931 = vdwg.mxu0
        %v932 = vand.u32 %v285, 4294901760
        %933 = vmatpush.msra.mxu0 %v932
        %v934 = vand.u32 %v282, 4294901760
        %935 = vmatpush.msra.mxu0 %v934
        %v936 = vand.u32 %v279, 4294901760
        %937 = vmatpush.msra.mxu0 %v936
        %v938 = vand.u32 %v276, 4294901760
        %939 = vmatpush.msra.mxu0 %v938
        %v940 = vand.u32 %v273, 4294901760
        %941 = vmatpush.msra.mxu0 %v940
        %v942 = vand.u32 %v270, 4294901760
        %943 = vmatpush.msra.mxu0 %v942
        %v944 = vand.u32 %v267, 4294901760
        %945 = vmatpush.msra.mxu0 %v944
        %v946 = vand.u32 %v264, 4294901760
        %947 = vmatpush.msra.mxu0 %v946
        %v948 = vand.u32 %v261, 4294901760
        %949 = vmatpush.msra.mxu0 %v948
        %v950 = vand.u32 %v258, 4294901760
        %951 = vmatpush.msra.mxu0 %v950
        %v952 = vand.u32 %v255, 4294901760
        %953 = vmatpush.msra.mxu0 %v952
        %v954 = vand.u32 %v252, 4294901760
        %955 = vmatpush.msra.mxu0 %v954
        %v956 = vand.u32 %v249, 4294901760
        %957 = vmatpush.msra.mxu0 %v956
        %v958 = vand.u32 %v246, 4294901760
        %959 = vmatpush.msra.mxu0 %v958
        %v960 = vand.u32 %v243, 4294901760
        %961 = vmatpush.msra.mxu0 %v960
        %v962 = vand.u32 %v240, 4294901760
        %963 = vmatpush.msra.mxu0 %v962
        %v964 = vand.u32 %v238, 4294901760
        %965 = vmatmul.f32.gmra.mxu0 %v964
        %v966 = vpop.f32.mrf.mxu0
        %v967 = vadd.f32 %v930, %v966
        %968 = vdwg.mxu0
        %v969 = vand.u32 %v286, 4294901760
        %970 = vmatpush.msra.mxu0 %v969
        %v971 = vand.u32 %v283, 4294901760
        %972 = vmatpush.msra.mxu0 %v971
        %v973 = vand.u32 %v280, 4294901760
        %974 = vmatpush.msra.mxu0 %v973
        %v975 = vand.u32 %v277, 4294901760
        %976 = vmatpush.msra.mxu0 %v975
        %v977 = vand.u32 %v274, 4294901760
        %978 = vmatpush.msra.mxu0 %v977
        %v979 = vand.u32 %v271, 4294901760
        %980 = vmatpush.msra.mxu0 %v979
        %v981 = vand.u32 %v268, 4294901760
        %982 = vmatpush.msra.mxu0 %v981
        %v983 = vand.u32 %v265, 4294901760
        %984 = vmatpush.msra.mxu0 %v983
        %v985 = vand.u32 %v262, 4294901760
        %986 = vmatpush.msra.mxu0 %v985
        %v987 = vand.u32 %v259, 4294901760
        %988 = vmatpush.msra.mxu0 %v987
        %v989 = vand.u32 %v256, 4294901760
        %990 = vmatpush.msra.mxu0 %v989
        %v991 = vand.u32 %v253, 4294901760
        %992 = vmatpush.msra.mxu0 %v991
        %v993 = vand.u32 %v250, 4294901760
        %994 = vmatpush.msra.mxu0 %v993
        %v995 = vand.u32 %v247, 4294901760
        %996 = vmatpush.msra.mxu0 %v995
        %v997 = vand.u32 %v244, 4294901760
        %998 = vmatpush.msra.mxu0 %v997
        %v999 = vand.u32 %v241, 4294901760
        %1000 = vmatpush.msra.mxu0 %v999
        %v1001 = vand.u32 %v238, 4294901760
        %v1002 = vsub.f32 %v238, %v1001
        %v1003 = vand.u32 %v1002, 4294901760
        %v1004 = vsub.f32 %v1002, %v1003
        %v1005 = vand.u32 %v1004, 4294901760
        %1006 = vmatmul.f32.gmra.mxu0 %v1005
        %v1007 = vpop.f32.mrf.mxu0
        %v1008 = vadd.f32 0.0, %v1007
        %1009 = vdwg.mxu0
        %v1010 = vand.u32 %v286, 4294901760
        %v1011 = vsub.f32 %v286, %v1010
        %v1012 = vand.u32 %v1011, 4294901760
        %v1013 = vsub.f32 %v1011, %v1012
        %v1014 = vand.u32 %v1013, 4294901760
        %1015 = vmatpush.msra.mxu0 %v1014
        %v1016 = vand.u32 %v283, 4294901760
        %v1017 = vsub.f32 %v283, %v1016
        %v1018 = vand.u32 %v1017, 4294901760
        %v1019 = vsub.f32 %v1017, %v1018
        %v1020 = vand.u32 %v1019, 4294901760
        %1021 = vmatpush.msra.mxu0 %v1020
        %v1022 = vand.u32 %v280, 4294901760
        %v1023 = vsub.f32 %v280, %v1022
        %v1024 = vand.u32 %v1023, 4294901760
        %v1025 = vsub.f32 %v1023, %v1024
        %v1026 = vand.u32 %v1025, 4294901760
        %1027 = vmatpush.msra.mxu0 %v1026
        %v1028 = vand.u32 %v277, 4294901760
        %v1029 = vsub.f32 %v277, %v1028
        %v1030 = vand.u32 %v1029, 4294901760
        %v1031 = vsub.f32 %v1029, %v1030
        %v1032 = vand.u32 %v1031, 4294901760
        %1033 = vmatpush.msra.mxu0 %v1032
        %v1034 = vand.u32 %v274, 4294901760
        %v1035 = vsub.f32 %v274, %v1034
        %v1036 = vand.u32 %v1035, 4294901760
        %v1037 = vsub.f32 %v1035, %v1036
        %v1038 = vand.u32 %v1037, 4294901760
        %1039 = vmatpush.msra.mxu0 %v1038
        %v1040 = vand.u32 %v271, 4294901760
        %v1041 = vsub.f32 %v271, %v1040
        %v1042 = vand.u32 %v1041, 4294901760
        %v1043 = vsub.f32 %v1041, %v1042
        %v1044 = vand.u32 %v1043, 4294901760
        %1045 = vmatpush.msra.mxu0 %v1044
        %v1046 = vand.u32 %v268, 4294901760
        %v1047 = vsub.f32 %v268, %v1046
        %v1048 = vand.u32 %v1047, 4294901760
        %v1049 = vsub.f32 %v1047, %v1048
        %v1050 = vand.u32 %v1049, 4294901760
        %1051 = vmatpush.msra.mxu0 %v1050
        %v1052 = vand.u32 %v265, 4294901760
        %v1053 = vsub.f32 %v265, %v1052
        %v1054 = vand.u32 %v1053, 4294901760
        %v1055 = vsub.f32 %v1053, %v1054
        %v1056 = vand.u32 %v1055, 4294901760
        %1057 = vmatpush.msra.mxu0 %v1056
        %v1058 = vand.u32 %v262, 4294901760
        %v1059 = vsub.f32 %v262, %v1058
        %v1060 = vand.u32 %v1059, 4294901760
        %v1061 = vsub.f32 %v1059, %v1060
        %v1062 = vand.u32 %v1061, 4294901760
        %1063 = vmatpush.msra.mxu0 %v1062
        %v1064 = vand.u32 %v259, 4294901760
        %v1065 = vsub.f32 %v259, %v1064
        %v1066 = vand.u32 %v1065, 4294901760
        %v1067 = vsub.f32 %v1065, %v1066
        %v1068 = vand.u32 %v1067, 4294901760
        %1069 = vmatpush.msra.mxu0 %v1068
        %v1070 = vand.u32 %v256, 4294901760
        %v1071 = vsub.f32 %v256, %v1070
        %v1072 = vand.u32 %v1071, 4294901760
        %v1073 = vsub.f32 %v1071, %v1072
        %v1074 = vand.u32 %v1073, 4294901760
        %1075 = vmatpush.msra.mxu0 %v1074
        %v1076 = vand.u32 %v253, 4294901760
        %v1077 = vsub.f32 %v253, %v1076
        %v1078 = vand.u32 %v1077, 4294901760
        %v1079 = vsub.f32 %v1077, %v1078
        %v1080 = vand.u32 %v1079, 4294901760
        %1081 = vmatpush.msra.mxu0 %v1080
        %v1082 = vand.u32 %v250, 4294901760
        %v1083 = vsub.f32 %v250, %v1082
        %v1084 = vand.u32 %v1083, 4294901760
        %v1085 = vsub.f32 %v1083, %v1084
        %v1086 = vand.u32 %v1085, 4294901760
        %1087 = vmatpush.msra.mxu0 %v1086
        %v1088 = vand.u32 %v247, 4294901760
        %v1089 = vsub.f32 %v247, %v1088
        %v1090 = vand.u32 %v1089, 4294901760
        %v1091 = vsub.f32 %v1089, %v1090
        %v1092 = vand.u32 %v1091, 4294901760
        %1093 = vmatpush.msra.mxu0 %v1092
        %v1094 = vand.u32 %v244, 4294901760
        %v1095 = vsub.f32 %v244, %v1094
        %v1096 = vand.u32 %v1095, 4294901760
        %v1097 = vsub.f32 %v1095, %v1096
        %v1098 = vand.u32 %v1097, 4294901760
        %1099 = vmatpush.msra.mxu0 %v1098
        %v1100 = vand.u32 %v241, 4294901760
        %v1101 = vsub.f32 %v241, %v1100
        %v1102 = vand.u32 %v1101, 4294901760
        %v1103 = vsub.f32 %v1101, %v1102
        %v1104 = vand.u32 %v1103, 4294901760
        %1105 = vmatpush.msra.mxu0 %v1104
        %v1106 = vand.u32 %v238, 4294901760
        %1107 = vmatmul.f32.gmra.mxu0 %v1106
        %v1108 = vpop.f32.mrf.mxu0
        %v1109 = vadd.f32 %v1008, %v1108
        %1110 = vdwg.mxu0
        %v1111 = vand.u32 %v286, 4294901760
        %v1112 = vsub.f32 %v286, %v1111
        %1113 = vmatpush.msra.mxu0 %v1112
        %v1114 = vand.u32 %v283, 4294901760
        %v1115 = vsub.f32 %v283, %v1114
        %1116 = vmatpush.msra.mxu0 %v1115
        %v1117 = vand.u32 %v280, 4294901760
        %v1118 = vsub.f32 %v280, %v1117
        %1119 = vmatpush.msra.mxu0 %v1118
        %v1120 = vand.u32 %v277, 4294901760
        %v1121 = vsub.f32 %v277, %v1120
        %1122 = vmatpush.msra.mxu0 %v1121
        %v1123 = vand.u32 %v274, 4294901760
        %v1124 = vsub.f32 %v274, %v1123
        %1125 = vmatpush.msra.mxu0 %v1124
        %v1126 = vand.u32 %v271, 4294901760
        %v1127 = vsub.f32 %v271, %v1126
        %1128 = vmatpush.msra.mxu0 %v1127
        %v1129 = vand.u32 %v268, 4294901760
        %v1130 = vsub.f32 %v268, %v1129
        %1131 = vmatpush.msra.mxu0 %v1130
        %v1132 = vand.u32 %v265, 4294901760
        %v1133 = vsub.f32 %v265, %v1132
        %1134 = vmatpush.msra.mxu0 %v1133
        %v1135 = vand.u32 %v262, 4294901760
        %v1136 = vsub.f32 %v262, %v1135
        %1137 = vmatpush.msra.mxu0 %v1136
        %v1138 = vand.u32 %v259, 4294901760
        %v1139 = vsub.f32 %v259, %v1138
        %1140 = vmatpush.msra.mxu0 %v1139
        %v1141 = vand.u32 %v256, 4294901760
        %v1142 = vsub.f32 %v256, %v1141
        %1143 = vmatpush.msra.mxu0 %v1142
        %v1144 = vand.u32 %v253, 4294901760
        %v1145 = vsub.f32 %v253, %v1144
        %1146 = vmatpush.msra.mxu0 %v1145
        %v1147 = vand.u32 %v250, 4294901760
        %v1148 = vsub.f32 %v250, %v1147
        %1149 = vmatpush.msra.mxu0 %v1148
        %v1150 = vand.u32 %v247, 4294901760
        %v1151 = vsub.f32 %v247, %v1150
        %1152 = vmatpush.msra.mxu0 %v1151
        %v1153 = vand.u32 %v244, 4294901760
        %v1154 = vsub.f32 %v244, %v1153
        %1155 = vmatpush.msra.mxu0 %v1154
        %v1156 = vand.u32 %v241, 4294901760
        %v1157 = vsub.f32 %v241, %v1156
        %1158 = vmatpush.msra.mxu0 %v1157
        %v1159 = vand.u32 %v238, 4294901760
        %v1160 = vsub.f32 %v238, %v1159
        %1161 = vmatmul.f32.gmra.mxu0 %v1160
        %v1162 = vpop.f32.mrf.mxu0
        %v1163 = vadd.f32 %v1109, %v1162
        %1164 = vdwg.mxu0
        %v1165 = vand.u32 %v286, 4294901760
        %1166 = vmatpush.msra.mxu0 %v1165
        %v1167 = vand.u32 %v283, 4294901760
        %1168 = vmatpush.msra.mxu0 %v1167
        %v1169 = vand.u32 %v280, 4294901760
        %1170 = vmatpush.msra.mxu0 %v1169
        %v1171 = vand.u32 %v277, 4294901760
        %1172 = vmatpush.msra.mxu0 %v1171
        %v1173 = vand.u32 %v274, 4294901760
        %1174 = vmatpush.msra.mxu0 %v1173
        %v1175 = vand.u32 %v271, 4294901760
        %1176 = vmatpush.msra.mxu0 %v1175
        %v1177 = vand.u32 %v268, 4294901760
        %1178 = vmatpush.msra.mxu0 %v1177
        %v1179 = vand.u32 %v265, 4294901760
        %1180 = vmatpush.msra.mxu0 %v1179
        %v1181 = vand.u32 %v262, 4294901760
        %1182 = vmatpush.msra.mxu0 %v1181
        %v1183 = vand.u32 %v259, 4294901760
        %1184 = vmatpush.msra.mxu0 %v1183
        %v1185 = vand.u32 %v256, 4294901760
        %1186 = vmatpush.msra.mxu0 %v1185
        %v1187 = vand.u32 %v253, 4294901760
        %1188 = vmatpush.msra.mxu0 %v1187
        %v1189 = vand.u32 %v250, 4294901760
        %1190 = vmatpush.msra.mxu0 %v1189
        %v1191 = vand.u32 %v247, 4294901760
        %1192 = vmatpush.msra.mxu0 %v1191
        %v1193 = vand.u32 %v244, 4294901760
        %1194 = vmatpush.msra.mxu0 %v1193
        %v1195 = vand.u32 %v241, 4294901760
        %1196 = vmatpush.msra.mxu0 %v1195
        %v1197 = vand.u32 %v238, 4294901760
        %v1198 = vsub.f32 %v238, %v1197
        %v1199 = vand.u32 %v1198, 4294901760
        %1200 = vmatmul.f32.gmra.mxu0 %v1199
        %v1201 = vpop.f32.mrf.mxu0
        %v1202 = vadd.f32 %v1163, %v1201
        %1203 = vdwg.mxu0
        %v1204 = vand.u32 %v286, 4294901760
        %v1205 = vsub.f32 %v286, %v1204
        %v1206 = vand.u32 %v1205, 4294901760
        %1207 = vmatpush.msra.mxu0 %v1206
        %v1208 = vand.u32 %v283, 4294901760
        %v1209 = vsub.f32 %v283, %v1208
        %v1210 = vand.u32 %v1209, 4294901760
        %1211 = vmatpush.msra.mxu0 %v1210
        %v1212 = vand.u32 %v280, 4294901760
        %v1213 = vsub.f32 %v280, %v1212
        %v1214 = vand.u32 %v1213, 4294901760
        %1215 = vmatpush.msra.mxu0 %v1214
        %v1216 = vand.u32 %v277, 4294901760
        %v1217 = vsub.f32 %v277, %v1216
        %v1218 = vand.u32 %v1217, 4294901760
        %1219 = vmatpush.msra.mxu0 %v1218
        %v1220 = vand.u32 %v274, 4294901760
        %v1221 = vsub.f32 %v274, %v1220
        %v1222 = vand.u32 %v1221, 4294901760
        %1223 = vmatpush.msra.mxu0 %v1222
        %v1224 = vand.u32 %v271, 4294901760
        %v1225 = vsub.f32 %v271, %v1224
        %v1226 = vand.u32 %v1225, 4294901760
        %1227 = vmatpush.msra.mxu0 %v1226
        %v1228 = vand.u32 %v268, 4294901760
        %v1229 = vsub.f32 %v268, %v1228
        %v1230 = vand.u32 %v1229, 4294901760
        %1231 = vmatpush.msra.mxu0 %v1230
        %v1232 = vand.u32 %v265, 4294901760
        %v1233 = vsub.f32 %v265, %v1232
        %v1234 = vand.u32 %v1233, 4294901760
        %1235 = vmatpush.msra.mxu0 %v1234
        %v1236 = vand.u32 %v262, 4294901760
        %v1237 = vsub.f32 %v262, %v1236
        %v1238 = vand.u32 %v1237, 4294901760
        %1239 = vmatpush.msra.mxu0 %v1238
        %v1240 = vand.u32 %v259, 4294901760
        %v1241 = vsub.f32 %v259, %v1240
        %v1242 = vand.u32 %v1241, 4294901760
        %1243 = vmatpush.msra.mxu0 %v1242
        %v1244 = vand.u32 %v256, 4294901760
        %v1245 = vsub.f32 %v256, %v1244
        %v1246 = vand.u32 %v1245, 4294901760
        %1247 = vmatpush.msra.mxu0 %v1246
        %v1248 = vand.u32 %v253, 4294901760
        %v1249 = vsub.f32 %v253, %v1248
        %v1250 = vand.u32 %v1249, 4294901760
        %1251 = vmatpush.msra.mxu0 %v1250
        %v1252 = vand.u32 %v250, 4294901760
        %v1253 = vsub.f32 %v250, %v1252
        %v1254 = vand.u32 %v1253, 4294901760
        %1255 = vmatpush.msra.mxu0 %v1254
        %v1256 = vand.u32 %v247, 4294901760
        %v1257 = vsub.f32 %v247, %v1256
        %v1258 = vand.u32 %v1257, 4294901760
        %1259 = vmatpush.msra.mxu0 %v1258
        %v1260 = vand.u32 %v244, 4294901760
        %v1261 = vsub.f32 %v244, %v1260
        %v1262 = vand.u32 %v1261, 4294901760
        %1263 = vmatpush.msra.mxu0 %v1262
        %v1264 = vand.u32 %v241, 4294901760
        %v1265 = vsub.f32 %v241, %v1264
        %v1266 = vand.u32 %v1265, 4294901760
        %1267 = vmatpush.msra.mxu0 %v1266
        %v1268 = vand.u32 %v238, 4294901760
        %1269 = vmatmul.f32.gmra.mxu0 %v1268
        %v1270 = vpop.f32.mrf.mxu0
        %v1271 = vadd.f32 %v1202, %v1270
        %1272 = vdwg.mxu0
        %v1273 = vand.u32 %v286, 4294901760
        %1274 = vmatpush.msra.mxu0 %v1273
        %v1275 = vand.u32 %v283, 4294901760
        %1276 = vmatpush.msra.mxu0 %v1275
        %v1277 = vand.u32 %v280, 4294901760
        %1278 = vmatpush.msra.mxu0 %v1277
        %v1279 = vand.u32 %v277, 4294901760
        %1280 = vmatpush.msra.mxu0 %v1279
        %v1281 = vand.u32 %v274, 4294901760
        %1282 = vmatpush.msra.mxu0 %v1281
        %v1283 = vand.u32 %v271, 4294901760
        %1284 = vmatpush.msra.mxu0 %v1283
        %v1285 = vand.u32 %v268, 4294901760
        %1286 = vmatpush.msra.mxu0 %v1285
        %v1287 = vand.u32 %v265, 4294901760
        %1288 = vmatpush.msra.mxu0 %v1287
        %v1289 = vand.u32 %v262, 4294901760
        %1290 = vmatpush.msra.mxu0 %v1289
        %v1291 = vand.u32 %v259, 4294901760
        %1292 = vmatpush.msra.mxu0 %v1291
        %v1293 = vand.u32 %v256, 4294901760
        %1294 = vmatpush.msra.mxu0 %v1293
        %v1295 = vand.u32 %v253, 4294901760
        %1296 = vmatpush.msra.mxu0 %v1295
        %v1297 = vand.u32 %v250, 4294901760
        %1298 = vmatpush.msra.mxu0 %v1297
        %v1299 = vand.u32 %v247, 4294901760
        %1300 = vmatpush.msra.mxu0 %v1299
        %v1301 = vand.u32 %v244, 4294901760
        %1302 = vmatpush.msra.mxu0 %v1301
        %v1303 = vand.u32 %v241, 4294901760
        %1304 = vmatpush.msra.mxu0 %v1303
        %v1305 = vand.u32 %v238, 4294901760
        %1306 = vmatmul.f32.gmra.mxu0 %v1305
        %v1307 = vpop.f32.mrf.mxu0
        %v1308 = vadd.f32 %v1271, %v1307
        %1309 = vdwg.mxu0
        %v1310 = vld [vmem:[%s2] sm:$0x3]
        %v1311 = vld [vmem:[%s2 + $0x2] sm:$0x3]
        %v1312 = vld [vmem:[%s2 + $0x4] sm:$0x3]
        %v1313 = vld [vmem:[%s2 + $0x6] sm:$0x3]
        %v1314 = vld [vmem:[%s2 + $0x8] sm:$0x3]
        %v1315 = vld [vmem:[%s2 + $0xa] sm:$0x3]
        %v1316 = vld [vmem:[%s2 + $0xc] sm:$0x3]
        %v1317 = vld [vmem:[%s2 + $0xe] sm:$0x3]
        %v1318 = vld [vmem:[%s2 + $0x10] sm:$0x3]
        %v1319 = vld [vmem:[%s3] sm:$0xf]
        %v1320 = vld [vmem:[%s4] sm:$0x77]
        %v1321 = vpack.c.bf16 %v967, %v626
        %v1322 = vpack.c.bf16 %v1308, %v1308
        %v1324 = vunpack.c.l.b16 %v1321
        %v1325 = vunpack.c.h.b16 %v1321
        %v1326 = vpack.c.b16 %v1324, %v1324
        %v1327 = vpack.c.b16 %v1325, %v1325
        %vm1328 = vcmask 64512
        %v1330 = vsel %vm1328, %v1310, 0
        %vm1332 = vcmask 1043456
        %v1334 = vsel %vm1332, %v1326, 0
        %v1337 = vsel %vm1332, %v1327, 0
        %1339 = vmatpush.bf16.msra.mxu0 0
        %1340 = vmatpush.bf16.msra.mxu0 0
        %1341 = vmatpush.bf16.msra.mxu0 0
        %1342 = vmatpush.bf16.msra.mxu0 0
        %1343 = vmatpush.bf16.msra.mxu0 0
        %1344 = vmatpush.bf16.msra.mxu0 0
        %1345 = vmatpush.bf16.msra.mxu0 0
        %1346 = vmatpush.bf16.msra.mxu0 %v1334
        %1347 = vmatmul.bf16.gmra.mxu0 %v1330
        %v1348 = vpop.f32.mrf.mxu0
        %v1349 = vadd.f32 0.0, %v1348
        %v1350 = vpop.f32.mrf.mxu0
        %1351 = vdwg.mxu0
        %1352 = vmatpush.bf16.msra.mxu0 0
        %1353 = vmatpush.bf16.msra.mxu0 0
        %1354 = vmatpush.bf16.msra.mxu0 0
        %1355 = vmatpush.bf16.msra.mxu0 0
        %1356 = vmatpush.bf16.msra.mxu0 0
        %1357 = vmatpush.bf16.msra.mxu0 0
        %1358 = vmatpush.bf16.msra.mxu0 0
        %1359 = vmatpush.bf16.msra.mxu0 %v1337
        %1360 = vmatmul.bf16.gmra.mxu0 %v1330
        %v1361 = vpop.f32.mrf.mxu0
        %v1362 = vadd.f32 0.0, %v1361
        %v1363 = vpop.f32.mrf.mxu0
        %1364 = vdwg.mxu0
        %v1366 = vperm.slane %v1320, 0
        %v1367 = vperm.slane %v1320, 4
        %v1370 = vperm.slane %v1366, 0
        %v1371 = vperm.slane %v1367, 0
        %v1372 = vmul.f32 %v1349, %v1370
        %v1373 = vmul.f32 %v1362, %v1371
        %v1374 = vadd.f32 %v1372, 0.0
        %v1375 = vadd.f32 %v1373, 0.0
        %v1377 = vunpack.c.l.b16 %v1322
        %v1378 = vpack.c.b16 %v1377, %v1377
        %1379 = vrot.lane.b32.xlu0 %v1326, 127
        %v1380 = vpop.permute.xlu0 %1379
        %1381 = vrot.lane.b32.xlu0 %v1327, 127
        %v1382 = vpop.permute.xlu0 %1381
        %1383 = vrot.lane.b32.xlu0 %v1378, 127
        %v1384 = vpop.permute.xlu0 %1383
        %vm1385 = vcmask 1039360
        %v1386 = vsel %vm1385, %v1380, %v1382
        %v1387 = vsel %vm1385, %v1382, %v1384
        %v1389 = vsel %vm1328, %v1311, 0
        %v1392 = vsel %vm1332, %v1386, 0
        %v1395 = vsel %vm1332, %v1387, 0
        %1397 = vmatpush.bf16.msra.mxu0 0
        %1398 = vmatpush.bf16.msra.mxu0 0
        %1399 = vmatpush.bf16.msra.mxu0 0
        %1400 = vmatpush.bf16.msra.mxu0 0
        %1401 = vmatpush.bf16.msra.mxu0 0
        %1402 = vmatpush.bf16.msra.mxu0 0
        %1403 = vmatpush.bf16.msra.mxu0 0
        %1404 = vmatpush.bf16.msra.mxu0 %v1392
        %1405 = vmatmul.bf16.gmra.mxu0 %v1389
        %v1406 = vpop.f32.mrf.mxu0
        %v1407 = vadd.f32 0.0, %v1406
        %v1408 = vpop.f32.mrf.mxu0
        %1409 = vdwg.mxu0
        %1410 = vmatpush.bf16.msra.mxu0 0
        %1411 = vmatpush.bf16.msra.mxu0 0
        %1412 = vmatpush.bf16.msra.mxu0 0
        %1413 = vmatpush.bf16.msra.mxu0 0
        %1414 = vmatpush.bf16.msra.mxu0 0
        %1415 = vmatpush.bf16.msra.mxu0 0
        %1416 = vmatpush.bf16.msra.mxu0 0
        %1417 = vmatpush.bf16.msra.mxu0 %v1395
        %1418 = vmatmul.bf16.gmra.mxu0 %v1389
        %v1419 = vpop.f32.mrf.mxu0
        %v1420 = vadd.f32 0.0, %v1419
        %v1421 = vpop.f32.mrf.mxu0
        %1422 = vdwg.mxu0
        %v1423 = vadd.f32 %v1374, %v1407
        %v1424 = vadd.f32 %v1375, %v1420
        %1425 = vrot.lane.b32.xlu0 %v1326, 126
        %v1426 = vpop.permute.xlu0 %1425
        %1427 = vrot.lane.b32.xlu0 %v1327, 126
        %v1428 = vpop.permute.xlu0 %1427
        %1429 = vrot.lane.b32.xlu0 %v1378, 126
        %v1430 = vpop.permute.xlu0 %1429
        %vm1431 = vcmask 1031168
        %v1432 = vsel %vm1431, %v1426, %v1428
        %v1433 = vsel %vm1431, %v1428, %v1430
        %v1435 = vsel %vm1328, %v1312, 0
        %v1438 = vsel %vm1332, %v1432, 0
        %v1441 = vsel %vm1332, %v1433, 0
        %1443 = vmatpush.bf16.msra.mxu0 0
        %1444 = vmatpush.bf16.msra.mxu0 0
        %1445 = vmatpush.bf16.msra.mxu0 0
        %1446 = vmatpush.bf16.msra.mxu0 0
        %1447 = vmatpush.bf16.msra.mxu0 0
        %1448 = vmatpush.bf16.msra.mxu0 0
        %1449 = vmatpush.bf16.msra.mxu0 0
        %1450 = vmatpush.bf16.msra.mxu0 %v1438
        %1451 = vmatmul.bf16.gmra.mxu0 %v1435
        %v1452 = vpop.f32.mrf.mxu0
        %v1453 = vadd.f32 0.0, %v1452
        %v1454 = vpop.f32.mrf.mxu0
        %1455 = vdwg.mxu0
        %1456 = vmatpush.bf16.msra.mxu0 0
        %1457 = vmatpush.bf16.msra.mxu0 0
        %1458 = vmatpush.bf16.msra.mxu0 0
        %1459 = vmatpush.bf16.msra.mxu0 0
        %1460 = vmatpush.bf16.msra.mxu0 0
        %1461 = vmatpush.bf16.msra.mxu0 0
        %1462 = vmatpush.bf16.msra.mxu0 0
        %1463 = vmatpush.bf16.msra.mxu0 %v1441
        %1464 = vmatmul.bf16.gmra.mxu0 %v1435
        %v1465 = vpop.f32.mrf.mxu0
        %v1466 = vadd.f32 0.0, %v1465
        %v1467 = vpop.f32.mrf.mxu0
        %1468 = vdwg.mxu0
        %v1469 = vperm.slane %v1320, 2
        %v1470 = vperm.slane %v1320, 6
        %v1473 = vperm.slane %v1469, 2
        %v1474 = vperm.slane %v1470, 2
        %v1475 = vmul.f32 %v1453, %v1473
        %v1476 = vmul.f32 %v1466, %v1474
        %v1477 = vadd.f32 %v1423, %v1475
        %v1478 = vadd.f32 %v1424, %v1476
        %1479 = vrot.lane.b32.xlu0 %v1326, 112
        %v1480 = vpop.permute.xlu0 %1479
        %1481 = vrot.lane.b32.xlu0 %v1327, 112
        %v1482 = vpop.permute.xlu0 %1481
        %1483 = vrot.lane.b32.xlu0 %v1378, 112
        %v1484 = vpop.permute.xlu0 %1483
        %vm1485 = vcmask 916480
        %v1486 = vsel %vm1485, %v1480, %v1482
        %v1487 = vsel %vm1485, %v1482, %v1484
        %v1489 = vsel %vm1328, %v1313, 0
        %v1492 = vsel %vm1332, %v1486, 0
        %v1495 = vsel %vm1332, %v1487, 0
        %1497 = vmatpush.bf16.msra.mxu0 0
        %1498 = vmatpush.bf16.msra.mxu0 0
        %1499 = vmatpush.bf16.msra.mxu0 0
        %1500 = vmatpush.bf16.msra.mxu0 0
        %1501 = vmatpush.bf16.msra.mxu0 0
        %1502 = vmatpush.bf16.msra.mxu0 0
        %1503 = vmatpush.bf16.msra.mxu0 0
        %1504 = vmatpush.bf16.msra.mxu0 %v1492
        %1505 = vmatmul.bf16.gmra.mxu0 %v1489
        %v1506 = vpop.f32.mrf.mxu0
        %v1507 = vadd.f32 0.0, %v1506
        %v1508 = vpop.f32.mrf.mxu0
        %1509 = vdwg.mxu0
        %1510 = vmatpush.bf16.msra.mxu0 0
        %1511 = vmatpush.bf16.msra.mxu0 0
        %1512 = vmatpush.bf16.msra.mxu0 0
        %1513 = vmatpush.bf16.msra.mxu0 0
        %1514 = vmatpush.bf16.msra.mxu0 0
        %1515 = vmatpush.bf16.msra.mxu0 0
        %1516 = vmatpush.bf16.msra.mxu0 0
        %1517 = vmatpush.bf16.msra.mxu0 %v1495
        %1518 = vmatmul.bf16.gmra.mxu0 %v1489
        %v1519 = vpop.f32.mrf.mxu0
        %v1520 = vadd.f32 0.0, %v1519
        %v1521 = vpop.f32.mrf.mxu0
        %1522 = vdwg.mxu0
        %v1523 = vmul.f32 %v1507, %v1370
        %v1524 = vmul.f32 %v1520, %v1371
        %v1525 = vadd.f32 %v1477, %v1523
        %v1526 = vadd.f32 %v1478, %v1524
        %1527 = vrot.lane.b32.xlu0 %v1326, 111
        %v1528 = vpop.permute.xlu0 %1527
        %1529 = vrot.lane.b32.xlu0 %v1327, 111
        %v1530 = vpop.permute.xlu0 %1529
        %1531 = vrot.lane.b32.xlu0 %v1378, 111
        %v1532 = vpop.permute.xlu0 %1531
        %vm1533 = vcmask 908288
        %v1534 = vsel %vm1533, %v1528, %v1530
        %v1535 = vsel %vm1533, %v1530, %v1532
        %v1537 = vsel %vm1328, %v1314, 0
        %v1540 = vsel %vm1332, %v1534, 0
        %v1543 = vsel %vm1332, %v1535, 0
        %1545 = vmatpush.bf16.msra.mxu0 0
        %1546 = vmatpush.bf16.msra.mxu0 0
        %1547 = vmatpush.bf16.msra.mxu0 0
        %1548 = vmatpush.bf16.msra.mxu0 0
        %1549 = vmatpush.bf16.msra.mxu0 0
        %1550 = vmatpush.bf16.msra.mxu0 0
        %1551 = vmatpush.bf16.msra.mxu0 0
        %1552 = vmatpush.bf16.msra.mxu0 %v1540
        %1553 = vmatmul.bf16.gmra.mxu0 %v1537
        %v1554 = vpop.f32.mrf.mxu0
        %v1555 = vadd.f32 0.0, %v1554
        %v1556 = vpop.f32.mrf.mxu0
        %1557 = vdwg.mxu0
        %1558 = vmatpush.bf16.msra.mxu0 0
        %1559 = vmatpush.bf16.msra.mxu0 0
        %1560 = vmatpush.bf16.msra.mxu0 0
        %1561 = vmatpush.bf16.msra.mxu0 0
        %1562 = vmatpush.bf16.msra.mxu0 0
        %1563 = vmatpush.bf16.msra.mxu0 0
        %1564 = vmatpush.bf16.msra.mxu0 0
        %1565 = vmatpush.bf16.msra.mxu0 %v1543
        %1566 = vmatmul.bf16.gmra.mxu0 %v1537
        %v1567 = vpop.f32.mrf.mxu0
        %v1568 = vadd.f32 0.0, %v1567
        %v1569 = vpop.f32.mrf.mxu0
        %1570 = vdwg.mxu0
        %v1571 = vadd.f32 %v1525, %v1555
        %v1572 = vadd.f32 %v1526, %v1568
        %1573 = vrot.lane.b32.xlu0 %v1326, 110
        %v1574 = vpop.permute.xlu0 %1573
        %1575 = vrot.lane.b32.xlu0 %v1327, 110
        %v1576 = vpop.permute.xlu0 %1575
        %1577 = vrot.lane.b32.xlu0 %v1378, 110
        %v1578 = vpop.permute.xlu0 %1577
        %vm1579 = vcmask 900096
        %v1580 = vsel %vm1579, %v1574, %v1576
        %v1581 = vsel %vm1579, %v1576, %v1578
        %v1583 = vsel %vm1328, %v1315, 0
        %v1586 = vsel %vm1332, %v1580, 0
        %v1589 = vsel %vm1332, %v1581, 0
        %1591 = vmatpush.bf16.msra.mxu0 0
        %1592 = vmatpush.bf16.msra.mxu0 0
        %1593 = vmatpush.bf16.msra.mxu0 0
        %1594 = vmatpush.bf16.msra.mxu0 0
        %1595 = vmatpush.bf16.msra.mxu0 0
        %1596 = vmatpush.bf16.msra.mxu0 0
        %1597 = vmatpush.bf16.msra.mxu0 0
        %1598 = vmatpush.bf16.msra.mxu0 %v1586
        %1599 = vmatmul.bf16.gmra.mxu0 %v1583
        %v1600 = vpop.f32.mrf.mxu0
        %v1601 = vadd.f32 0.0, %v1600
        %v1602 = vpop.f32.mrf.mxu0
        %1603 = vdwg.mxu0
        %1604 = vmatpush.bf16.msra.mxu0 0
        %1605 = vmatpush.bf16.msra.mxu0 0
        %1606 = vmatpush.bf16.msra.mxu0 0
        %1607 = vmatpush.bf16.msra.mxu0 0
        %1608 = vmatpush.bf16.msra.mxu0 0
        %1609 = vmatpush.bf16.msra.mxu0 0
        %1610 = vmatpush.bf16.msra.mxu0 0
        %1611 = vmatpush.bf16.msra.mxu0 %v1589
        %1612 = vmatmul.bf16.gmra.mxu0 %v1583
        %v1613 = vpop.f32.mrf.mxu0
        %v1614 = vadd.f32 0.0, %v1613
        %v1615 = vpop.f32.mrf.mxu0
        %1616 = vdwg.mxu0
        %v1617 = vmul.f32 %v1601, %v1473
        %v1618 = vmul.f32 %v1614, %v1474
        %v1619 = vadd.f32 %v1571, %v1617
        %v1620 = vadd.f32 %v1572, %v1618
        %1621 = vrot.lane.b32.xlu0 %v1326, 96
        %v1622 = vpop.permute.xlu0 %1621
        %1623 = vrot.lane.b32.xlu0 %v1327, 96
        %v1624 = vpop.permute.xlu0 %1623
        %1625 = vrot.lane.b32.xlu0 %v1378, 96
        %v1626 = vpop.permute.xlu0 %1625
        %vm1627 = vcmask 785408
        %v1628 = vsel %vm1627, %v1622, %v1624
        %v1629 = vsel %vm1627, %v1624, %v1626
        %v1631 = vsel %vm1328, %v1316, 0
        %v1634 = vsel %vm1332, %v1628, 0
        %v1637 = vsel %vm1332, %v1629, 0
        %1639 = vmatpush.bf16.msra.mxu0 0
        %1640 = vmatpush.bf16.msra.mxu0 0
        %1641 = vmatpush.bf16.msra.mxu0 0
        %1642 = vmatpush.bf16.msra.mxu0 0
        %1643 = vmatpush.bf16.msra.mxu0 0
        %1644 = vmatpush.bf16.msra.mxu0 0
        %1645 = vmatpush.bf16.msra.mxu0 0
        %1646 = vmatpush.bf16.msra.mxu0 %v1634
        %1647 = vmatmul.bf16.gmra.mxu0 %v1631
        %v1648 = vpop.f32.mrf.mxu0
        %v1649 = vadd.f32 0.0, %v1648
        %v1650 = vpop.f32.mrf.mxu0
        %1651 = vdwg.mxu0
        %1652 = vmatpush.bf16.msra.mxu0 0
        %1653 = vmatpush.bf16.msra.mxu0 0
        %1654 = vmatpush.bf16.msra.mxu0 0
        %1655 = vmatpush.bf16.msra.mxu0 0
        %1656 = vmatpush.bf16.msra.mxu0 0
        %1657 = vmatpush.bf16.msra.mxu0 0
        %1658 = vmatpush.bf16.msra.mxu0 0
        %1659 = vmatpush.bf16.msra.mxu0 %v1637
        %1660 = vmatmul.bf16.gmra.mxu0 %v1631
        %v1661 = vpop.f32.mrf.mxu0
        %v1662 = vadd.f32 0.0, %v1661
        %v1663 = vpop.f32.mrf.mxu0
        %1664 = vdwg.mxu0
        %v1665 = vmul.f32 %v1649, %v1370
        %v1666 = vmul.f32 %v1662, %v1371
        %v1667 = vadd.f32 %v1619, %v1665
        %v1668 = vadd.f32 %v1620, %v1666
        %1669 = vrot.lane.b32.xlu0 %v1326, 95
        %v1670 = vpop.permute.xlu0 %1669
        %1671 = vrot.lane.b32.xlu0 %v1327, 95
        %v1672 = vpop.permute.xlu0 %1671
        %1673 = vrot.lane.b32.xlu0 %v1378, 95
        %v1674 = vpop.permute.xlu0 %1673
        %vm1675 = vcmask 777216
        %v1676 = vsel %vm1675, %v1670, %v1672
        %v1677 = vsel %vm1675, %v1672, %v1674
        %v1679 = vsel %vm1328, %v1317, 0
        %v1682 = vsel %vm1332, %v1676, 0
        %v1685 = vsel %vm1332, %v1677, 0
        %1687 = vmatpush.bf16.msra.mxu0 0
        %1688 = vmatpush.bf16.msra.mxu0 0
        %1689 = vmatpush.bf16.msra.mxu0 0
        %1690 = vmatpush.bf16.msra.mxu0 0
        %1691 = vmatpush.bf16.msra.mxu0 0
        %1692 = vmatpush.bf16.msra.mxu0 0
        %1693 = vmatpush.bf16.msra.mxu0 0
        %1694 = vmatpush.bf16.msra.mxu0 %v1682
        %1695 = vmatmul.bf16.gmra.mxu0 %v1679
        %v1696 = vpop.f32.mrf.mxu0
        %v1697 = vadd.f32 0.0, %v1696
        %v1698 = vpop.f32.mrf.mxu0
        %1699 = vdwg.mxu0
        %1700 = vmatpush.bf16.msra.mxu0 0
        %1701 = vmatpush.bf16.msra.mxu0 0
        %1702 = vmatpush.bf16.msra.mxu0 0
        %1703 = vmatpush.bf16.msra.mxu0 0
        %1704 = vmatpush.bf16.msra.mxu0 0
        %1705 = vmatpush.bf16.msra.mxu0 0
        %1706 = vmatpush.bf16.msra.mxu0 0
        %1707 = vmatpush.bf16.msra.mxu0 %v1685
        %1708 = vmatmul.bf16.gmra.mxu0 %v1679
        %v1709 = vpop.f32.mrf.mxu0
        %v1710 = vadd.f32 0.0, %v1709
        %v1711 = vpop.f32.mrf.mxu0
        %1712 = vdwg.mxu0
        %v1713 = vadd.f32 %v1667, %v1697
        %v1714 = vadd.f32 %v1668, %v1710
        %1715 = vrot.lane.b32.xlu0 %v1326, 94
        %v1716 = vpop.permute.xlu0 %1715
        %1717 = vrot.lane.b32.xlu0 %v1327, 94
        %v1718 = vpop.permute.xlu0 %1717
        %1719 = vrot.lane.b32.xlu0 %v1378, 94
        %v1720 = vpop.permute.xlu0 %1719
        %vm1721 = vcmask 769024
        %v1722 = vsel %vm1721, %v1716, %v1718
        %v1723 = vsel %vm1721, %v1718, %v1720
        %v1725 = vsel %vm1328, %v1318, 0
        %v1728 = vsel %vm1332, %v1722, 0
        %v1731 = vsel %vm1332, %v1723, 0
        %1733 = vmatpush.bf16.msra.mxu0 0
        %1734 = vmatpush.bf16.msra.mxu0 0
        %1735 = vmatpush.bf16.msra.mxu0 0
        %1736 = vmatpush.bf16.msra.mxu0 0
        %1737 = vmatpush.bf16.msra.mxu0 0
        %1738 = vmatpush.bf16.msra.mxu0 0
        %1739 = vmatpush.bf16.msra.mxu0 0
        %1740 = vmatpush.bf16.msra.mxu0 %v1728
        %1741 = vmatmul.bf16.gmra.mxu0 %v1725
        %v1742 = vpop.f32.mrf.mxu0
        %v1743 = vadd.f32 0.0, %v1742
        %v1744 = vpop.f32.mrf.mxu0
        %1745 = vdwg.mxu0
        %1746 = vmatpush.bf16.msra.mxu0 0
        %1747 = vmatpush.bf16.msra.mxu0 0
        %1748 = vmatpush.bf16.msra.mxu0 0
        %1749 = vmatpush.bf16.msra.mxu0 0
        %1750 = vmatpush.bf16.msra.mxu0 0
        %1751 = vmatpush.bf16.msra.mxu0 0
        %1752 = vmatpush.bf16.msra.mxu0 0
        %1753 = vmatpush.bf16.msra.mxu0 %v1731
        %1754 = vmatmul.bf16.gmra.mxu0 %v1725
        %v1755 = vpop.f32.mrf.mxu0
        %v1756 = vadd.f32 0.0, %v1755
        %v1757 = vpop.f32.mrf.mxu0
        %1758 = vdwg.mxu0
        %v1759 = vmul.f32 %v1743, %v1473
        %v1760 = vmul.f32 %v1756, %v1474
        %v1761 = vadd.f32 %v1713, %v1759
        %v1762 = vadd.f32 %v1714, %v1760
        %1764 = vset.pattern.permute.xlu0 0
        %1765 = vperm.xlu0 %1764, %v1319
        %v1766 = vpop.permute.xlu0 %1765
        %v1768 = vadd.f32 %v1761, %v1766
        %v1769 = vadd.f32 %v1762, %v1766
        %v1770 = vmax.f32 %v1768, 0.0
        %v1771 = vmax.f32 %v1769, 0.0
        %v1772 = vxor.u32 %v1768, 2147483648
        %v1773 = vxor.u32 %v1769, 2147483648
        %v1774 = vmul.f32 %v1772, 1.442695
        %v1775 = vpow.pop %v1774
        %v1776 = vmul.f32 %v1773, 1.442695
        %v1777 = vpow.pop %v1776
        %v1778 = vadd.f32 %v1775, 1.0
        %v1779 = vadd.f32 %v1777, 1.0
        %v1780 = vrcp.pop %v1778
        %v1781 = vmul.f32 %v1778, %v1780
        %v1782 = vsub.f32 1.0, %v1781
        %v1783 = vmul.f32 %v1780, %v1782
        %v1784 = vadd.f32 %v1780, %v1783
        %vm1785 = vweird.f32 %v1778
        %vm1786 = vweird.f32 %v1780
        %vm1787 = vmor %vm1785, %vm1786
        %v1788 = vsel %vm1787, %v1780, %v1784
        %v1789 = vand.u32 2147483647, %v1778
        %vm1790 = vcmp.eq.f32.partialorder %v1789, 8.507059e+37
        %v1791 = vand.u32 %v1778, 2147483648
        %v1792 = vor.u32 1.1754944e-38, %v1791
        %v1793 = vsel %vm1790, %v1792, %v1788
        %v1794 = vmul.f32 1.0, %v1793
        %v1795 = vrcp.pop %v1779
        %v1796 = vmul.f32 %v1779, %v1795
        %v1797 = vsub.f32 1.0, %v1796
        %v1798 = vmul.f32 %v1795, %v1797
        %v1799 = vadd.f32 %v1795, %v1798
        %vm1800 = vweird.f32 %v1779
        %vm1801 = vweird.f32 %v1795
        %vm1802 = vmor %vm1800, %vm1801
        %v1803 = vsel %vm1802, %v1795, %v1799
        %v1804 = vand.u32 2147483647, %v1779
        %vm1805 = vcmp.eq.f32.partialorder %v1804, 8.507059e+37
        %v1806 = vand.u32 %v1779, 2147483648
        %v1807 = vor.u32 1.1754944e-38, %v1806
        %v1808 = vsel %vm1805, %v1807, %v1803
        %v1809 = vmul.f32 1.0, %v1808
        %v1810 = vmul.f32 %v1770, %v1794
        %v1811 = vmul.f32 %v1771, %v1809
        %v1812 = vsel %vm1332, %v1810, 0.0
        %v1813 = vsel %vm1332, %v1811, 0.0
        %v1814 = vadd.f32 %v1812, %v1813
        %1815 = vadd.xlane.f32.xlu0 %v1814
        %v1816 = vpop.xlane.xlu0 %1815
        %v1817 = vmul.f32 %v1810, %v1810
        %v1818 = vmul.f32 %v1811, %v1811
        %v1819 = vsel %vm1332, %v1817, 0.0
        %v1820 = vsel %vm1332, %v1818, 0.0
        %v1821 = vadd.f32 %v1819, %v1820
        %1822 = vadd.xlane.f32.xlu0 %v1821
        %v1823 = vpop.xlane.xlu0 %1822
        %v1824 = vmul.f32 %v1816, 0.00390625
        %v1825 = vmul.f32 %v1823, 0.00390625
        %v1826 = vmul.f32 %v1824, %v1824
        %v1827 = vsub.f32 %v1825, %v1826
        %v1828 = vsub.f32 %v1810, %v1824
        %v1829 = vsub.f32 %v1811, %v1824
        %v1830 = vadd.f32 %v1827, 1e-05
        %v1831 = vrsqrt.pop %v1830
        %v1832 = vmul.f32 %v1831, %v1830
        %v1833 = vmul.f32 %v1832, %v1831
        %v1834 = vmul.f32 0.5, %v1833
        %v1835 = vsub.f32 1.5, %v1834
        %v1836 = vmul.f32 %v1831, %v1835
        %vm1837 = vweird.f32 %v1830
        %vm1838 = vweird.f32 %v1831
        %vm1839 = vmor %vm1837, %vm1838
        %v1840 = vsel %vm1839, %v1831, %v1836
        %v1841 = vmul.f32 %v1828, %v1840
        %v1842 = vmul.f32 %v1829, %v1840
        %v1845 = vrot.slane %v1842, 4
        %v1846 = vsel %vm1332, %v1841, %v1845
        %1848 = vst [vmem:[%s232] sm:$0xff] %v1846
        %s1849 = sand.u32 %s138, 1
        %s1850 = scalar_lea.sflag [#allocation4], %s1849
        %s1851 = sand.u32 %s138, 1
        %s1852 = smul.addr %s1851, 8
        %s1853 = scalar_lea.vmem [#allocation5], %s1852
        // Predicated region
        $region45: #{tpu_custom_call.1} parent=39 // pred_check
          %p1854 = pneg %p148
        $region46: #{tpu_custom_call.1} parent=39 // pred_check_branch
          %1856 = sbr.rel (%p1854) target = $region48
        $region47: #{tpu_custom_call.1} parent=39 // pred_region
          %1858 = vsyncadd %s1850, 0
          %s1859 = smul.addr %s20, 2
          %s1860 = smul.addr %s1859, 4
          %s1861 = scalar_lea.hbm %s5, %s1860
          %s1863 = sshll.u32 %s1853, 4
          %s1864 = int_to_ptr.vmem [resolvable:$true] %s1863
          %s1865 = sshll.u32 %s1861, 4
          %s1866 = int_to_ptr.hbm [resolvable:$true] %s1865
          %1868 = dma.vmem_to_hbm [thread:$0]  %s1864, 128, %s1866, %s1850
        $region48: #{tpu_custom_call.1} parent=39 // pred_fallthru
          _
      $region40: #{tpu_custom_call.1} parent=5 // pred_fallthru
        _
      %p1869 = scmp.le.s32.totalorder 2, %s15
      // Predicated region
      $region49: #{tpu_custom_call.1} parent=5 // pred_check
        %p1870 = pneg %p1869
      $region50: #{tpu_custom_call.1} parent=5 // pred_check_branch
        %1872 = sbr.rel (%p1870) target = $region52
      $region51: #{tpu_custom_call.1} parent=5 // pred_region
        %s1873 = ssub.s32 %s15, 2
        // Predicated region
        $region53: #{tpu_custom_call.1} parent=51 // pred_check
          %p1874 = pneg %p154
        $region54: #{tpu_custom_call.1} parent=51 // pred_check_branch
          %1876 = sbr.rel (%p1874) target = $region56
        $region55: #{tpu_custom_call.1} parent=51 // pred_region
          %s1877 = sand.u32 %s139, 1
          %s1878 = scalar_lea.sflag [#allocation4], %s1877
          %s1879 = sand.u32 %s139, 1
          %s1880 = smul.addr %s1879, 8
          %s1881 = scalar_lea.vmem [#allocation5], %s1880
          %1883 = dma.done %s1878, 128
        $region56: #{tpu_custom_call.1} parent=51 // pred_fallthru
          _
      $region52: #{tpu_custom_call.1} parent=5 // pred_fallthru
        _
    $region6: #{tpu_custom_call.1} parent=1 // loop_footer
      %s19 = sadd.s32 1, %s15
    $region7: #{tpu_custom_call.1} parent=1 // loop_footer_branch
      %14 = sbr.rel target = $region3
    $region8: #{tpu_custom_call.1} parent=1 // loop_exit
      _
    %1884 = vsyncpa [#allocation3], 1
    %s1885 = scalar_lea.sflag [#allocation3], 1
    %1886 = vsyncpa %s1885, 1
    %1887 = vsyncpa [#allocation4], 1
    %s1888 = scalar_lea.sflag [#allocation4], 1
    %1889 = vsyncpa %s1888, 1

</llo_original>
